<compile_context>
chip_gen: v6e
topology: v6e:2x2x1
jax: 0.10.0
libtpu: 0.0.40
codegen_flags: <defaults>
</compile_context>

<pallas_src>
import functools

import jax
import jax.numpy as jnp
from jax.experimental import pallas as pl
from jax.experimental.pallas import tpu as pltpu

LANE = 128
VMEM_LIMIT = 48 * 1024 * 1024           # explicit scoped-VMEM budget (all gens)
HW_RESIDENT_BYTES = 8 * 1024 * 1024     # keep HW VMEM-resident up to this size


# ----------------------------------------------------------------------------
# Kernels
# ----------------------------------------------------------------------------
def _feat_kernel(h_ref, w_ref, d_ref, o_ref):
    # HW' = d_inv_sqrt[row] * (H @ W')   (bf16 MXU, f32 accumulate, f32 d)
    hw = jnp.dot(h_ref[...], w_ref[...], preferred_element_type=jnp.float32)
    o_ref[...] = (hw * d_ref[...]).astype(o_ref.dtype)


def _agg_kernel(a_ref, hw_ref, d_ref, t_ref, *rest, tk, hw_resident, fuse_next):
    # acc  = (A+I)_int8 @ HW'                      (K-tiled, f32 accumulator)
    # h    = relu(d_row * acc + shift)             (normalization + BN + ReLU)
    # out  = d_row * (h @ W_next')   if fused      (next layer's HW')
    #      = h                        otherwise
    if fuse_next:
        wn_ref, o_ref, acc_ref = rest
    else:
        o_ref, acc_ref = rest

    k = pl.program_id(1)

    @pl.when(k == 0)
    def _():
        acc_ref[...] = jnp.zeros_like(acc_ref)

    if hw_resident:
        start = pl.multiple_of(k * tk, tk)
        hw_blk = hw_ref[pl.ds(start, tk), :]
    else:
        hw_blk = hw_ref[...]

    acc_ref[...] += jnp.dot(a_ref[...].astype(jnp.bfloat16), hw_blk,
                            preferred_element_type=jnp.float32)

    @pl.when(k == pl.num_programs(1) - 1)
    def _():
        d = d_ref[...]
        h = jnp.maximum(acc_ref[...] * d + t_ref[...], 0.0)
        if fuse_next:
            out = jnp.dot(h.astype(jnp.bfloat16), wn_ref[...],
                          preferred_element_type=jnp.float32) * d
        else:
            out = h
        o_ref[...] = out.astype(o_ref.dtype)


def _head_kernel(p_ref, h_ref, lw1_ref, lb1_ref, lw2_ref, lb2_ref,
                 o_ref, acc_ref):
    # global_add_pool (K-tiled, f32 accumulator) -> f32 lin1 + relu -> f32 lin2
    k = pl.program_id(0)

    @pl.when(k == 0)
    def _():
        acc_ref[...] = jnp.zeros_like(acc_ref)

    acc_ref[...] += jnp.dot(p_ref[...], h_ref[...],
                            preferred_element_type=jnp.float32)

    @pl.when(k == pl.num_programs(0) - 1)
    def _():
        g = jnp.maximum(
            jnp.dot(acc_ref[...], lw1_ref[...],
                    preferred_element_type=jnp.float32) + lb1_ref[...], 0.0)
        o_ref[...] = (jnp.dot(g, lw2_ref[...],
                              preferred_element_type=jnp.float32)
                      + lb2_ref[...]).astype(o_ref.dtype)


# ----------------------------------------------------------------------------
# Tiling helpers
# ----------------------------------------------------------------------------
def _round_up(x, m):
    return ((x + m - 1) // m) * m


def _pick_tile(n, candidates=(2048, 1024, 512, 256, 128)):
    # Prefer big 128-aligned tiles to amortize per-grid-step overhead (~0.35us)
    # and push toward the HBM roofline plateau.
    for c in candidates:
        if n % c == 0:
            return c
    return n


def _pick_row_tile(n, candidates=(2048, 1024, 512, 256, 128)):
    # Row axis is "parallel": keep >= 2 row blocks so v7x's 2 TCs both work.
    for c in candidates:
        if n % c == 0 and n // c >= 2:
            return c
    half = n // 2
    if n % 2 == 0 and half % 32 == 0:   # 32: int8 sublane packing granularity
        return half
    return n


def _pad_to(arr, shape):
    return jnp.pad(arr, [(0, s - d) for d, s in zip(arr.shape, shape)])


# ----------------------------------------------------------------------------
# Pallas wrappers
# ----------------------------------------------------------------------------
def _feature_transform(h, w, d):
    n_pad, k_pad = h.shape
    h_pad = w.shape[1]
    tm = _pick_row_tile(n_pad)
    return pl.pallas_call(
        _feat_kernel,
        out_shape=jax.ShapeDtypeStruct((n_pad, h_pad), jnp.bfloat16),
        grid_spec=pltpu.PrefetchScalarGridSpec(
            num_scalar_prefetch=0,
            grid=(n_pad // tm,),
            in_specs=[pl.BlockSpec((tm, k_pad), lambda i: (i, 0)),
                      pl.BlockSpec((k_pad, h_pad), lambda i: (0, 0)),
                      pl.BlockSpec((tm, 1), lambda i: (i, 0))],
            out_specs=pl.BlockSpec((tm, h_pad), lambda i: (i, 0))),
        compiler_params=pltpu.CompilerParams(
            dimension_semantics=("parallel",),
            vmem_limit_bytes=VMEM_LIMIT),
        cost_estimate=pl.CostEstimate(
            flops=2 * n_pad * k_pad * h_pad,
            transcendentals=0,
            bytes_accessed=2 * (n_pad * k_pad + k_pad * h_pad + n_pad * h_pad)),
    )(h, w, d)


def _aggregate(a_int8, hw, d, t, w_next=None):
    """out = relu(d_row * ((A+I)_int8 @ HW') + shift) [@ W_next' * d_row]."""
    n_pad = a_int8.shape[0]
    h_pad = hw.shape[1]
    tm = _pick_row_tile(n_pad)
    tk = _pick_tile(n_pad)
    hw_resident = (n_pad * h_pad * 2) <= HW_RESIDENT_BYTES
    fuse_next = w_next is not None

    kern = functools.partial(_agg_kernel, tk=tk, hw_resident=hw_resident,
                             fuse_next=fuse_next)

    if hw_resident:
        hw_spec = pl.BlockSpec((n_pad, h_pad), lambda i, k: (0, 0))
    else:
        hw_spec = pl.BlockSpec((tk, h_pad), lambda i, k: (k, 0))

    in_specs = [pl.BlockSpec((tm, tk), lambda i, k: (i, k)),   # int8 A tile
                hw_spec,                                        # bf16 HW'
                pl.BlockSpec((tm, 1), lambda i, k: (i, 0)),     # f32 d_row
                pl.BlockSpec((1, h_pad), lambda i, k: (0, 0))]  # f32 shift
    operands = [a_int8, hw, d, t]
    flops = 2 * n_pad * n_pad * h_pad
    if fuse_next:
        in_specs.append(pl.BlockSpec((h_pad, h_pad), lambda i, k: (0, 0)))
        operands.append(w_next)
        flops += 2 * n_pad * h_pad * h_pad

    return pl.pallas_call(
        kern,
        out_shape=jax.ShapeDtypeStruct((n_pad, h_pad), jnp.bfloat16),
        grid_spec=pltpu.PrefetchScalarGridSpec(
            num_scalar_prefetch=0,
            grid=(n_pad // tm, n_pad // tk),          # reduction axis last
            in_specs=in_specs,
            out_specs=pl.BlockSpec((tm, h_pad), lambda i, k: (i, 0)),
            scratch_shapes=[pltpu.VMEM((tm, h_pad), jnp.float32)]),
        compiler_params=pltpu.CompilerParams(
            dimension_semantics=("parallel", "arbitrary"),
            vmem_limit_bytes=VMEM_LIMIT),
        cost_estimate=pl.CostEstimate(
            flops=flops,
            transcendentals=0,
            bytes_accessed=n_pad * n_pad + 6 * n_pad * h_pad),
    )(*operands)


def _pooled_head(pool, h3, lw1, lb1, lw2, lb2):
    g_pad, n_pad = pool.shape
    h_pad = h3.shape[1]
    c_pad = lw2.shape[1]
    tk = _pick_tile(n_pad)
    return pl.pallas_call(
        _head_kernel,
        out_shape=jax.ShapeDtypeStruct((g_pad, c_pad), jnp.float32),
        grid_spec=pltpu.PrefetchScalarGridSpec(
            num_scalar_prefetch=0,
            grid=(n_pad // tk,),
            in_specs=[pl.BlockSpec((g_pad, tk), lambda k: (0, k)),
                      pl.BlockSpec((tk, h_pad), lambda k: (k, 0)),
                      pl.BlockSpec((h_pad, h_pad), lambda k: (0, 0)),
                      pl.BlockSpec((1, h_pad), lambda k: (0, 0)),
                      pl.BlockSpec((h_pad, c_pad), lambda k: (0, 0)),
                      pl.BlockSpec((1, c_pad), lambda k: (0, 0))],
            out_specs=pl.BlockSpec((g_pad, c_pad), lambda k: (0, 0)),
            scratch_shapes=[pltpu.VMEM((g_pad, h_pad), jnp.float32)]),
        compiler_params=pltpu.CompilerParams(
            dimension_semantics=("arbitrary",),
            vmem_limit_bytes=VMEM_LIMIT),
        cost_estimate=pl.CostEstimate(
            flops=2 * (g_pad * n_pad * h_pad + g_pad * h_pad * h_pad
                       + g_pad * h_pad * c_pad),
            transcendentals=0,
            bytes_accessed=2 * (g_pad * n_pad + n_pad * h_pad)
                           + 4 * (h_pad * h_pad + h_pad * c_pad + g_pad * c_pad)),
    )(pool, h3, lw1, lb1, lw2, lb2)


# ----------------------------------------------------------------------------
# Graph glue (plain JAX) — compact dtypes, built directly at padded shape
# ----------------------------------------------------------------------------
def build_graph_operands(edge_index, num_nodes, n_pad):
    """(A+I) as exact int8 0/1 at padded shape + f32 D^-1/2 column vector.

    PyG GCNConv convention: A[dst, src] = 1; self-loops added only where
    missing (duplicate edges / existing self-loops stay weight 1 via .set).
    """
    src, dst = edge_index[0], edge_index[1]
    adj = jnp.zeros((n_pad, n_pad), jnp.int8)
    adj = adj.at[dst, src].set(jnp.int8(1))
    nodes = jnp.arange(num_nodes, dtype=jnp.int32)
    adj = adj.at[nodes, nodes].set(jnp.int8(1))
    deg = jnp.sum(adj.astype(jnp.float32), axis=1, keepdims=True)   # (n_pad,1)
    d_inv_sqrt = jnp.where(deg > 0.0, jax.lax.rsqrt(deg), 0.0)
    return adj, d_inv_sqrt


def build_pool_matrix_padded(batch, g_pad, n_pad):
    n = batch.shape[0]
    pool = jnp.zeros((g_pad, n_pad), jnp.bfloat16)       # 0/1 exact in bf16
    pool = pool.at[batch, jnp.arange(n)].set(jnp.bfloat16(1.0))
    return pool


# ----------------------------------------------------------------------------
# Forward pass
# ----------------------------------------------------------------------------
@functools.partial(jax.jit, static_argnames=("num_graphs",))
def gcn_model_forward(x, edge_index, batch, params, num_graphs):
    n, f = x.shape
    hidden = params["conv1_w"].shape[1]
    num_classes = params["lin2_w"].shape[1]

    n_pad = max(LANE, _round_up(n, LANE))
    f_pad = max(LANE, _round_up(f, LANE))
    h_pad = max(LANE, _round_up(hidden, LANE))
    c_pad = max(LANE, _round_up(num_classes, LANE))
    g_pad = max(8, _round_up(num_graphs, 8))

    adj_i8, d_inv_sqrt = build_graph_operands(edge_index, n, n_pad)
    pool_p = build_pool_matrix_padded(batch, g_pad, n_pad)

    x_p = _pad_to(x, (n_pad, f_pad)).astype(jnp.bfloat16)

    # Fold BatchNorm (eval, running stats) + GCNConv bias:
    #   bn(z + b) = z*s + t,  s folded into the conv weight (W' = W*s),
    #   t = beta - mean*s + b*s kept as the finalize shift.
    def bn_fold(bnp, conv_b):
        s = bnp["gamma"] / jnp.sqrt(bnp["running_var"] + 1e-5)
        t = bnp["beta"] - bnp["running_mean"] * s + conv_b * s
        return s, _pad_to(t[None, :], (1, h_pad)).astype(jnp.float32)

    s1, t1 = bn_fold(params["bn1"], params["conv1_b"])
    s2, t2 = bn_fold(params["bn2"], params["conv2_b"])
    s3, t3 = bn_fold(params["bn3"], params["conv3_b"])

    w1s_p = _pad_to(params["conv1_w"] * s1[None, :], (f_pad, h_pad)).astype(jnp.bfloat16)
    w2s_p = _pad_to(params["conv2_w"] * s2[None, :], (h_pad, h_pad)).astype(jnp.bfloat16)
    w3s_p = _pad_to(params["conv3_w"] * s3[None, :], (h_pad, h_pad)).astype(jnp.bfloat16)

    lw1_p = _pad_to(params["lin1_w"], (h_pad, h_pad)).astype(jnp.float32)
    lb1_p = _pad_to(params["lin1_b"][None, :], (1, h_pad)).astype(jnp.float32)
    lw2_p = _pad_to(params["lin2_w"], (h_pad, c_pad)).astype(jnp.float32)
    lb2_p = _pad_to(params["lin2_b"][None, :], (1, c_pad)).astype(jnp.float32)

    # Layer 1 feature transform:  HW1' = d * (X @ W1')
    hw1 = _feature_transform(x_p, w1s_p, d_inv_sqrt)
    # Layers 1 & 2 aggregation fused with the NEXT layer's feature transform.
    hw2 = _aggregate(adj_i8, hw1, d_inv_sqrt, t1, w_next=w2s_p)
    hw3 = _aggregate(adj_i8, hw2, d_inv_sqrt, t2, w_next=w3s_p)
    # Layer 3 aggregation produces h3 directly (Dropout = identity in eval).
    h3 = _aggregate(adj_i8, hw3, d_inv_sqrt, t3, w_next=None)

    # global_add_pool + lin1 + relu + lin2 (pooled values stay f32 into lin1).
    out = _pooled_head(pool_p, h3, lw1_p, lb1_p, lw2_p, lb2_p)
    out = out[:num_graphs, :num_classes]

    # torch: x.squeeze(dim=1)
    if num_classes == 1:
        out = out[:, 0]
    return out


# ----------------------------------------------------------------------------
# Pure-JAX f32 reference (identical eval-mode semantics)
# ----------------------------------------------------------------------------
def build_normalized_adjacency(edge_index, num_nodes):
    src, dst = edge_index[0], edge_index[1]
    adj = jnp.zeros((num_nodes, num_nodes), jnp.float32)
    adj = adj.at[dst, src].set(1.0)
    adj = jnp.maximum(adj, jnp.eye(num_nodes, dtype=jnp.float32))
    deg = jnp.sum(adj, axis=1)
    d_inv_sqrt = jnp.where(deg > 0, 1.0 / jnp.sqrt(deg), 0.0)
    return d_inv_sqrt[:, None] * adj * d_inv_sqrt[None, :]


def reference_forward(x, edge_index, batch, params, num_graphs):
    a_hat = build_normalized_adjacency(edge_index, x.shape[0])
    pool = (jnp.arange(num_graphs)[:, None] == batch[None, :]).astype(jnp.float32)

    def bn(h, p):
        return (h - p["running_mean"]) / jnp.sqrt(p["running_var"] + 1e-5) \
               * p["gamma"] + p["beta"]

    h = a_hat @ (x @ params["conv1_w"]) + params["conv1_b"]
    h = jnp.maximum(bn(h, params["bn1"]), 0.0)
    h = a_hat @ (h @ params["conv2_w"]) + params["conv2_b"]
    h = jnp.maximum(bn(h, params["bn2"]), 0.0)
    h = a_hat @ (h @ params["conv3_w"]) + params["conv3_b"]
    h = jnp.maximum(bn(h, params["bn3"]), 0.0)
    g = pool @ h
    g = jnp.maximum(g @ params["lin1_w"] + params["lin1_b"], 0.0)
    out = g @ params["lin2_w"] + params["lin2_b"]
    return out[:, 0] if params["lin2_w"].shape[1] == 1 else out


# ----------------------------------------------------------------------------
# Parameter init
# ----------------------------------------------------------------------------
def init_params(key, num_features, hidden_size, num_classes):
    keys = jax.random.split(key, 12)

    def glorot(k, shape):
        fan_in, fan_out = shape
        lim = jnp.sqrt(6.0 / (fan_in + fan_out))
        return jax.random.uniform(k, shape, jnp.float32, -lim, lim)

    def bn_params(kg, kb):
        return dict(
            gamma=1.0 + 0.1 * jax.random.normal(kg, (hidden_size,), jnp.float32),
            beta=0.1 * jax.random.normal(kb, (hidden_size,), jnp.float32),
            running_mean=jnp.zeros((hidden_size,), jnp.float32),
            running_var=jnp.ones((hidden_size,), jnp.float32),
        )

    return dict(
        conv1_w=glorot(keys[0], (num_features, hidden_size)),
        conv1_b=jnp.zeros((hidden_size,), jnp.float32),
        conv2_w=glorot(keys[1], (hidden_size, hidden_size)),
        conv2_b=jnp.zeros((hidden_size,), jnp.float32),
        conv3_w=glorot(keys[2], (hidden_size, hidden_size)),
        conv3_b=jnp.zeros((hidden_size,), jnp.float32),
        bn1=bn_params(keys[3], keys[4]),
        bn2=bn_params(keys[5], keys[6]),
        bn3=bn_params(keys[7], keys[8]),
        lin1_w=glorot(keys[9], (hidden_size, hidden_size)),
        lin1_b=jnp.zeros((hidden_size,), jnp.float32),
        lin2_w=glorot(keys[10], (hidden_size, num_classes)),
        lin2_b=jnp.zeros((num_classes,), jnp.float32),
    )


if __name__ == "__main__":
    NUM_FEATURES = 8
    HIDDEN = 32
    NUM_CLASSES = 1
    NUM_NODES = 16
    NUM_GRAPHS = 2

    key = jax.random.PRNGKey(0)
    k_x, k_p = jax.random.split(key)

    # Node features [N, F]
    x = jax.random.normal(k_x, (NUM_NODES, NUM_FEATURES), jnp.float32)

    # Two ring graphs of 8 nodes each (undirected: both edge directions listed)
    def ring_edges(offset, n):
        src = jnp.arange(n) + offset
        dst = (jnp.arange(n) + 1) % n + offset
        return jnp.stack([jnp.concatenate([src, dst]),
                          jnp.concatenate([dst, src])], axis=0)

    e0 = ring_edges(0, 8)
    e1 = ring_edges(8, 8)
    edge_index = jnp.concatenate([e0, e1], axis=1).astype(jnp.int32)  # [2, E]

    # batch assignment: nodes 0..7 -> graph 0, nodes 8..15 -> graph 1
    batch = jnp.concatenate([jnp.zeros(8, jnp.int32), jnp.ones(8, jnp.int32)])

    params = init_params(k_p, NUM_FEATURES, HIDDEN, NUM_CLASSES)

    out = gcn_model_forward(x, edge_index, batch, params, NUM_GRAPHS)
    out = jax.block_until_ready(out)

    ref = reference_forward(x, edge_index, batch, params, NUM_GRAPHS)
    ref = jax.block_until_ready(ref)

    assert out.shape == (NUM_GRAPHS,), f"unexpected output shape {out.shape}"
    # bf16 MXU operands / activations (f32 accumulation, exact int8 A,
    # f32 normalization + head) vs f32 reference.
    if not jnp.allclose(out, ref, atol=5e-2, rtol=5e-2):
        raise AssertionError(f"mismatch: kernel={out}, ref={ref}")

    print("KERNEL_OK")
</pallas_src>

<mosaic_0001>
module attributes {stable_mosaic.version = 11 : i64} {
  func.func @_feat_kernel(%arg0: i32, %arg1: memref<64x128xbf16, #tpu.memory_space<vmem>>, %arg2: memref<128x128xbf16, #tpu.memory_space<vmem>>, %arg3: memref<64x1xf32, #tpu.memory_space<vmem>>, %arg4: memref<64x128xbf16, #tpu.memory_space<vmem>>) attributes {dimension_semantics = [#tpu.dimension_semantics<parallel>], iteration_bounds = array<i64: 2>, scalar_prefetch = 0 : i64, scratch_operands = 0 : i64, tpu.core_type = #tpu.core_type<tc>, window_params = [{transform_indices = @transform_0, window_bounds = array<i64: 64, 128>}, {pipeline_mode = #tpu.pipeline_mode<synchronous>, transform_indices = @transform_1, window_bounds = array<i64: 128, 128>}, {transform_indices = @transform_2, window_bounds = array<i64: 64, 1>}, {transform_indices = @transform_3, window_bounds = array<i64: 64, 128>}]} {
    %c0 = arith.constant 0 : index
    %c0_0 = arith.constant 0 : index
    %0 = vector.load %arg1[%c0, %c0_0] : memref<64x128xbf16, #tpu.memory_space<vmem>>, vector<64x128xbf16>
    %c0_1 = arith.constant 0 : index
    %c0_2 = arith.constant 0 : index
    %1 = vector.load %arg2[%c0_1, %c0_2] : memref<128x128xbf16, #tpu.memory_space<vmem>>, vector<128x128xbf16>
    %cst = arith.constant dense<0.000000e+00> : vector<64x128xf32>
    %2 = tpu.matmul %0, %1, %cst {dimension_numbers = #tpu.dot_dimension_numbers<[1], [0], [0], [1], [0, 0, 1, 1], [], []>} : vector<64x128xbf16>, vector<128x128xbf16>, vector<64x128xf32> -> vector<64x128xf32>
    %c0_3 = arith.constant 0 : index
    %c0_4 = arith.constant 0 : index
    %3 = vector.load %arg3[%c0_3, %c0_4] : memref<64x1xf32, #tpu.memory_space<vmem>>, vector<64x1xf32>
    %4 = vector.broadcast %3 : vector<64x1xf32> to vector<64x128xf32>
    %5 = arith.mulf %2, %4 : vector<64x128xf32>
    %6 = arith.truncf %5 : vector<64x128xf32> to vector<64x128xbf16>
    %c0_5 = arith.constant 0 : index
    %c0_6 = arith.constant 0 : index
    %7 = vector.load %arg4[%c0_5, %c0_6] : memref<64x128xbf16, #tpu.memory_space<vmem>>, vector<64x128xbf16>
    tpu.vector_store %arg4[%c0_5, %c0_6], %6 {strides = array<i32>} : memref<64x128xbf16, #tpu.memory_space<vmem>>, vector<64x128xbf16>,
    return
  }
  func.func @transform_0(%arg0: i32) -> (i32, i32) {
    %c0_i32 = arith.constant 0 : i32
    %c0_i32_0 = arith.constant 0 : i32
    return %arg0, %c0_i32 : i32, i32
  }
  func.func @transform_1(%arg0: i32) -> (i32, i32) {
    %c0_i32 = arith.constant 0 : i32
    %c0_i32_0 = arith.constant 0 : i32
    %c0_i32_1 = arith.constant 0 : i32
    return %c0_i32, %c0_i32_0 : i32, i32
  }
  func.func @transform_2(%arg0: i32) -> (i32, i32) {
    %c0_i32 = arith.constant 0 : i32
    %c0_i32_0 = arith.constant 0 : i32
    return %arg0, %c0_i32 : i32, i32
  }
  func.func @transform_3(%arg0: i32) -> (i32, i32) {
    %c0_i32 = arith.constant 0 : i32
    %c0_i32_0 = arith.constant 0 : i32
    return %arg0, %c0_i32 : i32, i32
  }
}

module attributes {stable_mosaic.version = 11 : i64} {
  func.func @_agg_kernel(%arg0: i32, %arg1: i32, %arg2: memref<64x128xi8, #tpu.memory_space<vmem>>, %arg3: memref<128x128xbf16, #tpu.memory_space<vmem>>, %arg4: memref<64x1xf32, #tpu.memory_space<vmem>>, %arg5: memref<1x128xf32, #tpu.memory_space<vmem>>, %arg6: memref<128x128xbf16, #tpu.memory_space<vmem>>, %arg7: memref<64x128xbf16, #tpu.memory_space<vmem>>, %arg8: memref<64x128xf32, #tpu.memory_space<vmem>>) attributes {dimension_semantics = [#tpu.dimension_semantics<parallel>, #tpu.dimension_semantics<arbitrary>], iteration_bounds = array<i64: 2, 1>, scalar_prefetch = 0 : i64, scratch_operands = 1 : i64, tpu.core_type = #tpu.core_type<tc>, window_params = [{transform_indices = @transform_0, window_bounds = array<i64: 64, 128>}, {pipeline_mode = #tpu.pipeline_mode<synchronous>, transform_indices = @transform_1, window_bounds = array<i64: 128, 128>}, {transform_indices = @transform_2, window_bounds = array<i64: 64, 1>}, {pipeline_mode = #tpu.pipeline_mode<synchronous>, transform_indices = @transform_3, window_bounds = array<i64: 1, 128>}, {pipeline_mode = #tpu.pipeline_mode<synchronous>, transform_indices = @transform_4, window_bounds = array<i64: 128, 128>}, {transform_indices = @transform_5, window_bounds = array<i64: 64, 128>}]} {
    %c0_i32 = arith.constant 0 : i32
    %0 = arith.cmpi eq, %arg1, %c0_i32 : i32
    %1 = arith.extui %0 : i1 to i32
    %c0_i32_0 = arith.constant 0 : i32
    %2 = arith.cmpi ne, %1, %c0_i32_0 : i32
    scf.if %2 {
      %cst_9 = arith.constant 0.000000e+00 : f32
      %16 = vector.broadcast %cst_9 : f32 to vector<64x128xf32>
      %c0_10 = arith.constant 0 : index
      %c0_11 = arith.constant 0 : index
      %17 = vector.load %arg8[%c0_10, %c0_11] : memref<64x128xf32, #tpu.memory_space<vmem>>, vector<64x128xf32>
      tpu.vector_store %arg8[%c0_10, %c0_11], %16 {strides = array<i32>} : memref<64x128xf32, #tpu.memory_space<vmem>>, vector<64x128xf32>,
    } else {
    }
    %c128_i32 = arith.constant 128 : i32
    %3 = arith.muli %arg1, %c128_i32 : i32
    %4 = tpu.assume_multiple %3, 128 : i32
    %5 = arith.index_cast %4 : i32 to index
    %c0 = arith.constant 0 : index
    %6 = vector.load %arg3[%5, %c0] : memref<128x128xbf16, #tpu.memory_space<vmem>>, vector<128x128xbf16>
    %c0_1 = arith.constant 0 : index
    %c0_2 = arith.constant 0 : index
    %7 = vector.load %arg8[%c0_1, %c0_2] : memref<64x128xf32, #tpu.memory_space<vmem>>, vector<64x128xf32>
    %c0_3 = arith.constant 0 : index
    %c0_4 = arith.constant 0 : index
    %8 = vector.load %arg2[%c0_3, %c0_4] : memref<64x128xi8, #tpu.memory_space<vmem>>, vector<64x128xi8>
    %9 = arith.sitofp %8 : vector<64x128xi8> to vector<64x128xbf16>
    %cst = arith.constant dense<0.000000e+00> : vector<64x128xf32>
    %10 = tpu.matmul %9, %6, %cst {dimension_numbers = #tpu.dot_dimension_numbers<[1], [0], [0], [1], [0, 0, 1, 1], [], []>} : vector<64x128xbf16>, vector<128x128xbf16>, vector<64x128xf32> -> vector<64x128xf32>
    %11 = arith.addf %7, %10 : vector<64x128xf32>
    %c0_5 = arith.constant 0 : index
    %c0_6 = arith.constant 0 : index
    %12 = vector.load %arg8[%c0_5, %c0_6] : memref<64x128xf32, #tpu.memory_space<vmem>>, vector<64x128xf32>
    tpu.vector_store %arg8[%c0_5, %c0_6], %11 {strides = array<i32>} : memref<64x128xf32, #tpu.memory_space<vmem>>, vector<64x128xf32>,
    %c0_i32_7 = arith.constant 0 : i32
    %13 = arith.cmpi eq, %arg1, %c0_i32_7 : i32
    %14 = arith.extui %13 : i1 to i32
    %c0_i32_8 = arith.constant 0 : i32
    %15 = arith.cmpi ne, %14, %c0_i32_8 : i32
    scf.if %15 {
      %c0_9 = arith.constant 0 : index
      %c0_10 = arith.constant 0 : index
      %16 = vector.load %arg4[%c0_9, %c0_10] : memref<64x1xf32, #tpu.memory_space<vmem>>, vector<64x1xf32>
      %c0_11 = arith.constant 0 : index
      %c0_12 = arith.constant 0 : index
      %17 = vector.load %arg8[%c0_11, %c0_12] : memref<64x128xf32, #tpu.memory_space<vmem>>, vector<64x128xf32>
      %18 = vector.broadcast %16 : vector<64x1xf32> to vector<64x128xf32>
      %19 = arith.mulf %17, %18 : vector<64x128xf32>
      %c0_13 = arith.constant 0 : index
      %c0_14 = arith.constant 0 : index
      %20 = vector.load %arg5[%c0_13, %c0_14] : memref<1x128xf32, #tpu.memory_space<vmem>>, vector<1x128xf32>
      %21 = vector.broadcast %20 : vector<1x128xf32> to vector<64x128xf32>
      %22 = arith.addf %19, %21 : vector<64x128xf32>
      %cst_15 = arith.constant 0.000000e+00 : f32
      %23 = vector.broadcast %cst_15 : f32 to vector<64x128xf32>
      %24 = arith.maximumf %22, %23 : vector<64x128xf32>
      %25 = arith.truncf %24 : vector<64x128xf32> to vector<64x128xbf16>
      %c0_16 = arith.constant 0 : index
      %c0_17 = arith.constant 0 : index
      %26 = vector.load %arg6[%c0_16, %c0_17] : memref<128x128xbf16, #tpu.memory_space<vmem>>, vector<128x128xbf16>
      %cst_18 = arith.constant dense<0.000000e+00> : vector<64x128xf32>
      %27 = tpu.matmul %25, %26, %cst_18 {dimension_numbers = #tpu.dot_dimension_numbers<[1], [0], [0], [1], [0, 0, 1, 1], [], []>} : vector<64x128xbf16>, vector<128x128xbf16>, vector<64x128xf32> -> vector<64x128xf32>
      %28 = vector.broadcast %16 : vector<64x1xf32> to vector<64x128xf32>
      %29 = arith.mulf %27, %28 : vector<64x128xf32>
      %30 = arith.truncf %29 : vector<64x128xf32> to vector<64x128xbf16>
      %c0_19 = arith.constant 0 : index
      %c0_20 = arith.constant 0 : index
      %31 = vector.load %arg7[%c0_19, %c0_20] : memref<64x128xbf16, #tpu.memory_space<vmem>>, vector<64x128xbf16>
      tpu.vector_store %arg7[%c0_19, %c0_20], %30 {strides = array<i32>} : memref<64x128xbf16, #tpu.memory_space<vmem>>, vector<64x128xbf16>,
    } else {
    }
    return
  }
  func.func @transform_0(%arg0: i32, %arg1: i32) -> (i32, i32) {
    %c0_i32 = arith.constant 0 : i32
    return %arg0, %arg1 : i32, i32
  }
  func.func @transform_1(%arg0: i32, %arg1: i32) -> (i32, i32) {
    %c0_i32 = arith.constant 0 : i32
    %c0_i32_0 = arith.constant 0 : i32
    %c0_i32_1 = arith.constant 0 : i32
    return %c0_i32, %c0_i32_0 : i32, i32
  }
  func.func @transform_2(%arg0: i32, %arg1: i32) -> (i32, i32) {
    %c0_i32 = arith.constant 0 : i32
    %c0_i32_0 = arith.constant 0 : i32
    return %arg0, %c0_i32 : i32, i32
  }
  func.func @transform_3(%arg0: i32, %arg1: i32) -> (i32, i32) {
    %c0_i32 = arith.constant 0 : i32
    %c0_i32_0 = arith.constant 0 : i32
    %c0_i32_1 = arith.constant 0 : i32
    return %c0_i32, %c0_i32_0 : i32, i32
  }
  func.func @transform_4(%arg0: i32, %arg1: i32) -> (i32, i32) {
    %c0_i32 = arith.constant 0 : i32
    %c0_i32_0 = arith.constant 0 : i32
    %c0_i32_1 = arith.constant 0 : i32
    return %c0_i32, %c0_i32_0 : i32, i32
  }
  func.func @transform_5(%arg0: i32, %arg1: i32) -> (i32, i32) {
    %c0_i32 = arith.constant 0 : i32
    %c0_i32_0 = arith.constant 0 : i32
    return %arg0, %c0_i32 : i32, i32
  }
}

module attributes {stable_mosaic.version = 11 : i64} {
  func.func @_agg_kernel(%arg0: i32, %arg1: i32, %arg2: memref<64x128xi8, #tpu.memory_space<vmem>>, %arg3: memref<128x128xbf16, #tpu.memory_space<vmem>>, %arg4: memref<64x1xf32, #tpu.memory_space<vmem>>, %arg5: memref<1x128xf32, #tpu.memory_space<vmem>>, %arg6: memref<64x128xbf16, #tpu.memory_space<vmem>>, %arg7: memref<64x128xf32, #tpu.memory_space<vmem>>) attributes {dimension_semantics = [#tpu.dimension_semantics<parallel>, #tpu.dimension_semantics<arbitrary>], iteration_bounds = array<i64: 2, 1>, scalar_prefetch = 0 : i64, scratch_operands = 1 : i64, tpu.core_type = #tpu.core_type<tc>, window_params = [{transform_indices = @transform_0, window_bounds = array<i64: 64, 128>}, {pipeline_mode = #tpu.pipeline_mode<synchronous>, transform_indices = @transform_1, window_bounds = array<i64: 128, 128>}, {transform_indices = @transform_2, window_bounds = array<i64: 64, 1>}, {pipeline_mode = #tpu.pipeline_mode<synchronous>, transform_indices = @transform_3, window_bounds = array<i64: 1, 128>}, {transform_indices = @transform_4, window_bounds = array<i64: 64, 128>}]} {
    %c0_i32 = arith.constant 0 : i32
    %0 = arith.cmpi eq, %arg1, %c0_i32 : i32
    %1 = arith.extui %0 : i1 to i32
    %c0_i32_0 = arith.constant 0 : i32
    %2 = arith.cmpi ne, %1, %c0_i32_0 : i32
    scf.if %2 {
      %cst_9 = arith.constant 0.000000e+00 : f32
      %16 = vector.broadcast %cst_9 : f32 to vector<64x128xf32>
      %c0_10 = arith.constant 0 : index
      %c0_11 = arith.constant 0 : index
      %17 = vector.load %arg7[%c0_10, %c0_11] : memref<64x128xf32, #tpu.memory_space<vmem>>, vector<64x128xf32>
      tpu.vector_store %arg7[%c0_10, %c0_11], %16 {strides = array<i32>} : memref<64x128xf32, #tpu.memory_space<vmem>>, vector<64x128xf32>,
    } else {
    }
    %c128_i32 = arith.constant 128 : i32
    %3 = arith.muli %arg1, %c128_i32 : i32
    %4 = tpu.assume_multiple %3, 128 : i32
    %5 = arith.index_cast %4 : i32 to index
    %c0 = arith.constant 0 : index
    %6 = vector.load %arg3[%5, %c0] : memref<128x128xbf16, #tpu.memory_space<vmem>>, vector<128x128xbf16>
    %c0_1 = arith.constant 0 : index
    %c0_2 = arith.constant 0 : index
    %7 = vector.load %arg7[%c0_1, %c0_2] : memref<64x128xf32, #tpu.memory_space<vmem>>, vector<64x128xf32>
    %c0_3 = arith.constant 0 : index
    %c0_4 = arith.constant 0 : index
    %8 = vector.load %arg2[%c0_3, %c0_4] : memref<64x128xi8, #tpu.memory_space<vmem>>, vector<64x128xi8>
    %9 = arith.sitofp %8 : vector<64x128xi8> to vector<64x128xbf16>
    %cst = arith.constant dense<0.000000e+00> : vector<64x128xf32>
    %10 = tpu.matmul %9, %6, %cst {dimension_numbers = #tpu.dot_dimension_numbers<[1], [0], [0], [1], [0, 0, 1, 1], [], []>} : vector<64x128xbf16>, vector<128x128xbf16>, vector<64x128xf32> -> vector<64x128xf32>
    %11 = arith.addf %7, %10 : vector<64x128xf32>
    %c0_5 = arith.constant 0 : index
    %c0_6 = arith.constant 0 : index
    %12 = vector.load %arg7[%c0_5, %c0_6] : memref<64x128xf32, #tpu.memory_space<vmem>>, vector<64x128xf32>
    tpu.vector_store %arg7[%c0_5, %c0_6], %11 {strides = array<i32>} : memref<64x128xf32, #tpu.memory_space<vmem>>, vector<64x128xf32>,
    %c0_i32_7 = arith.constant 0 : i32
    %13 = arith.cmpi eq, %arg1, %c0_i32_7 : i32
    %14 = arith.extui %13 : i1 to i32
    %c0_i32_8 = arith.constant 0 : i32
    %15 = arith.cmpi ne, %14, %c0_i32_8 : i32
    scf.if %15 {
      %c0_9 = arith.constant 0 : index
      %c0_10 = arith.constant 0 : index
      %16 = vector.load %arg4[%c0_9, %c0_10] : memref<64x1xf32, #tpu.memory_space<vmem>>, vector<64x1xf32>
      %c0_11 = arith.constant 0 : index
      %c0_12 = arith.constant 0 : index
      %17 = vector.load %arg7[%c0_11, %c0_12] : memref<64x128xf32, #tpu.memory_space<vmem>>, vector<64x128xf32>
      %18 = vector.broadcast %16 : vector<64x1xf32> to vector<64x128xf32>
      %19 = arith.mulf %17, %18 : vector<64x128xf32>
      %c0_13 = arith.constant 0 : index
      %c0_14 = arith.constant 0 : index
      %20 = vector.load %arg5[%c0_13, %c0_14] : memref<1x128xf32, #tpu.memory_space<vmem>>, vector<1x128xf32>
      %21 = vector.broadcast %20 : vector<1x128xf32> to vector<64x128xf32>
      %22 = arith.addf %19, %21 : vector<64x128xf32>
      %cst_15 = arith.constant 0.000000e+00 : f32
      %23 = vector.broadcast %cst_15 : f32 to vector<64x128xf32>
      %24 = arith.maximumf %22, %23 : vector<64x128xf32>
      %25 = arith.truncf %24 : vector<64x128xf32> to vector<64x128xbf16>
      %c0_16 = arith.constant 0 : index
      %c0_17 = arith.constant 0 : index
      %26 = vector.load %arg6[%c0_16, %c0_17] : memref<64x128xbf16, #tpu.memory_space<vmem>>, vector<64x128xbf16>
      tpu.vector_store %arg6[%c0_16, %c0_17], %25 {strides = array<i32>} : memref<64x128xbf16, #tpu.memory_space<vmem>>, vector<64x128xbf16>,
    } else {
    }
    return
  }
  func.func @transform_0(%arg0: i32, %arg1: i32) -> (i32, i32) {
    %c0_i32 = arith.constant 0 : i32
    return %arg0, %arg1 : i32, i32
  }
  func.func @transform_1(%arg0: i32, %arg1: i32) -> (i32, i32) {
    %c0_i32 = arith.constant 0 : i32
    %c0_i32_0 = arith.constant 0 : i32
    %c0_i32_1 = arith.constant 0 : i32
    return %c0_i32, %c0_i32_0 : i32, i32
  }
  func.func @transform_2(%arg0: i32, %arg1: i32) -> (i32, i32) {
    %c0_i32 = arith.constant 0 : i32
    %c0_i32_0 = arith.constant 0 : i32
    return %arg0, %c0_i32 : i32, i32
  }
  func.func @transform_3(%arg0: i32, %arg1: i32) -> (i32, i32) {
    %c0_i32 = arith.constant 0 : i32
    %c0_i32_0 = arith.constant 0 : i32
    %c0_i32_1 = arith.constant 0 : i32
    return %c0_i32, %c0_i32_0 : i32, i32
  }
  func.func @transform_4(%arg0: i32, %arg1: i32) -> (i32, i32) {
    %c0_i32 = arith.constant 0 : i32
    %c0_i32_0 = arith.constant 0 : i32
    return %arg0, %c0_i32 : i32, i32
  }
}

module attributes {stable_mosaic.version = 11 : i64} {
  func.func @_head_kernel(%arg0: i32, %arg1: memref<8x128xbf16, #tpu.memory_space<vmem>>, %arg2: memref<128x128xbf16, #tpu.memory_space<vmem>>, %arg3: memref<128x128xf32, #tpu.memory_space<vmem>>, %arg4: memref<1x128xf32, #tpu.memory_space<vmem>>, %arg5: memref<128x128xf32, #tpu.memory_space<vmem>>, %arg6: memref<1x128xf32, #tpu.memory_space<vmem>>, %arg7: memref<8x128xf32, #tpu.memory_space<vmem>>, %arg8: memref<8x128xf32, #tpu.memory_space<vmem>>) attributes {dimension_semantics = [#tpu.dimension_semantics<arbitrary>], iteration_bounds = array<i64: 1>, scalar_prefetch = 0 : i64, scratch_operands = 1 : i64, tpu.core_type = #tpu.core_type<tc>, window_params = [{transform_indices = @transform_0, window_bounds = array<i64: 8, 128>}, {transform_indices = @transform_1, window_bounds = array<i64: 128, 128>}, {pipeline_mode = #tpu.pipeline_mode<synchronous>, transform_indices = @transform_2, window_bounds = array<i64: 128, 128>}, {pipeline_mode = #tpu.pipeline_mode<synchronous>, transform_indices = @transform_3, window_bounds = array<i64: 1, 128>}, {pipeline_mode = #tpu.pipeline_mode<synchronous>, transform_indices = @transform_4, window_bounds = array<i64: 128, 128>}, {pipeline_mode = #tpu.pipeline_mode<synchronous>, transform_indices = @transform_5, window_bounds = array<i64: 1, 128>}, {pipeline_mode = #tpu.pipeline_mode<synchronous>, transform_indices = @transform_6, window_bounds = array<i64: 8, 128>}]} {
    %c0_i32 = arith.constant 0 : i32
    %0 = arith.cmpi eq, %arg0, %c0_i32 : i32
    %1 = arith.extui %0 : i1 to i32
    %c0_i32_0 = arith.constant 0 : i32
    %2 = arith.cmpi ne, %1, %c0_i32_0 : i32
    scf.if %2 {
      %cst_10 = arith.constant 0.000000e+00 : f32
      %12 = vector.broadcast %cst_10 : f32 to vector<8x128xf32>
      %c0_11 = arith.constant 0 : index
      %c0_12 = arith.constant 0 : index
      %13 = vector.load %arg8[%c0_11, %c0_12] : memref<8x128xf32, #tpu.memory_space<vmem>>, vector<8x128xf32>
      tpu.vector_store %arg8[%c0_11, %c0_12], %12 {strides = array<i32>} : memref<8x128xf32, #tpu.memory_space<vmem>>, vector<8x128xf32>,
    } else {
    }
    %c0 = arith.constant 0 : index
    %c0_1 = arith.constant 0 : index
    %3 = vector.load %arg8[%c0, %c0_1] : memref<8x128xf32, #tpu.memory_space<vmem>>, vector<8x128xf32>
    %c0_2 = arith.constant 0 : index
    %c0_3 = arith.constant 0 : index
    %4 = vector.load %arg1[%c0_2, %c0_3] : memref<8x128xbf16, #tpu.memory_space<vmem>>, vector<8x128xbf16>
    %c0_4 = arith.constant 0 : index
    %c0_5 = arith.constant 0 : index
    %5 = vector.load %arg2[%c0_4, %c0_5] : memref<128x128xbf16, #tpu.memory_space<vmem>>, vector<128x128xbf16>
    %cst = arith.constant dense<0.000000e+00> : vector<8x128xf32>
    %6 = tpu.matmul %4, %5, %cst {dimension_numbers = #tpu.dot_dimension_numbers<[1], [0], [0], [1], [0, 0, 1, 1], [], []>} : vector<8x128xbf16>, vector<128x128xbf16>, vector<8x128xf32> -> vector<8x128xf32>
    %7 = arith.addf %3, %6 : vector<8x128xf32>
    %c0_6 = arith.constant 0 : index
    %c0_7 = arith.constant 0 : index
    %8 = vector.load %arg8[%c0_6, %c0_7] : memref<8x128xf32, #tpu.memory_space<vmem>>, vector<8x128xf32>
    tpu.vector_store %arg8[%c0_6, %c0_7], %7 {strides = array<i32>} : memref<8x128xf32, #tpu.memory_space<vmem>>, vector<8x128xf32>,
    %c0_i32_8 = arith.constant 0 : i32
    %9 = arith.cmpi eq, %arg0, %c0_i32_8 : i32
    %10 = arith.extui %9 : i1 to i32
    %c0_i32_9 = arith.constant 0 : i32
    %11 = arith.cmpi ne, %10, %c0_i32_9 : i32
    scf.if %11 {
      %c0_10 = arith.constant 0 : index
      %c0_11 = arith.constant 0 : index
      %12 = vector.load %arg8[%c0_10, %c0_11] : memref<8x128xf32, #tpu.memory_space<vmem>>, vector<8x128xf32>
      %c0_12 = arith.constant 0 : index
      %c0_13 = arith.constant 0 : index
      %13 = vector.load %arg3[%c0_12, %c0_13] : memref<128x128xf32, #tpu.memory_space<vmem>>, vector<128x128xf32>
      %cst_14 = arith.constant dense<0.000000e+00> : vector<8x128xf32>
      %14 = tpu.matmul %12, %13, %cst_14 {dimension_numbers = #tpu.dot_dimension_numbers<[1], [0], [0], [1], [0, 0, 1, 1], [], []>} : vector<8x128xf32>, vector<128x128xf32>, vector<8x128xf32> -> vector<8x128xf32>
      %c0_15 = arith.constant 0 : index
      %c0_16 = arith.constant 0 : index
      %15 = vector.load %arg4[%c0_15, %c0_16] : memref<1x128xf32, #tpu.memory_space<vmem>>, vector<1x128xf32>
      %16 = vector.broadcast %15 : vector<1x128xf32> to vector<8x128xf32>
      %17 = arith.addf %14, %16 : vector<8x128xf32>
      %cst_17 = arith.constant 0.000000e+00 : f32
      %18 = vector.broadcast %cst_17 : f32 to vector<8x128xf32>
      %19 = arith.maximumf %17, %18 : vector<8x128xf32>
      %c0_18 = arith.constant 0 : index
      %c0_19 = arith.constant 0 : index
      %20 = vector.load %arg5[%c0_18, %c0_19] : memref<128x128xf32, #tpu.memory_space<vmem>>, vector<128x128xf32>
      %cst_20 = arith.constant dense<0.000000e+00> : vector<8x128xf32>
      %21 = tpu.matmul %19, %20, %cst_20 {dimension_numbers = #tpu.dot_dimension_numbers<[1], [0], [0], [1], [0, 0, 1, 1], [], []>} : vector<8x128xf32>, vector<128x128xf32>, vector<8x128xf32> -> vector<8x128xf32>
      %c0_21 = arith.constant 0 : index
      %c0_22 = arith.constant 0 : index
      %22 = vector.load %arg6[%c0_21, %c0_22] : memref<1x128xf32, #tpu.memory_space<vmem>>, vector<1x128xf32>
      %23 = vector.broadcast %22 : vector<1x128xf32> to vector<8x128xf32>
      %24 = arith.addf %21, %23 : vector<8x128xf32>
      %c0_23 = arith.constant 0 : index
      %c0_24 = arith.constant 0 : index
      %25 = vector.load %arg7[%c0_23, %c0_24] : memref<8x128xf32, #tpu.memory_space<vmem>>, vector<8x128xf32>
      tpu.vector_store %arg7[%c0_23, %c0_24], %24 {strides = array<i32>} : memref<8x128xf32, #tpu.memory_space<vmem>>, vector<8x128xf32>,
    } else {
    }
    return
  }
  func.func @transform_0(%arg0: i32) -> (i32, i32) {
    %c0_i32 = arith.constant 0 : i32
    %c0_i32_0 = arith.constant 0 : i32
    return %c0_i32, %arg0 : i32, i32
  }
  func.func @transform_1(%arg0: i32) -> (i32, i32) {
    %c0_i32 = arith.constant 0 : i32
    %c0_i32_0 = arith.constant 0 : i32
    return %arg0, %c0_i32 : i32, i32
  }
  func.func @transform_2(%arg0: i32) -> (i32, i32) {
    %c0_i32 = arith.constant 0 : i32
    %c0_i32_0 = arith.constant 0 : i32
    %c0_i32_1 = arith.constant 0 : i32
    return %c0_i32, %c0_i32_0 : i32, i32
  }
  func.func @transform_3(%arg0: i32) -> (i32, i32) {
    %c0_i32 = arith.constant 0 : i32
    %c0_i32_0 = arith.constant 0 : i32
    %c0_i32_1 = arith.constant 0 : i32
    return %c0_i32, %c0_i32_0 : i32, i32
  }
  func.func @transform_4(%arg0: i32) -> (i32, i32) {
    %c0_i32 = arith.constant 0 : i32
    %c0_i32_0 = arith.constant 0 : i32
    %c0_i32_1 = arith.constant 0 : i32
    return %c0_i32, %c0_i32_0 : i32, i32
  }
  func.func @transform_5(%arg0: i32) -> (i32, i32) {
    %c0_i32 = arith.constant 0 : i32
    %c0_i32_0 = arith.constant 0 : i32
    %c0_i32_1 = arith.constant 0 : i32
    return %c0_i32, %c0_i32_0 : i32, i32
  }
  func.func @transform_6(%arg0: i32) -> (i32, i32) {
    %c0_i32 = arith.constant 0 : i32
    %c0_i32_0 = arith.constant 0 : i32
    %c0_i32_1 = arith.constant 0 : i32
    return %c0_i32, %c0_i32_0 : i32, i32
  }
}

</mosaic_0001>

<llo_original>
// kernel: gcn_model_forward.5
$region0: #{gcn_model_forward.5}
  #allocation0 [shape = 'u32[]', space=smem, size = 0x4, offset = 0x4, fixed_abs, tag = 'smem constant byte address 0x4 - core index']
  #allocation1 [shape = 'u32[144,128]{1,0:T(1,128)}', space=vmem, size = 0x12000, scoped, tag = 'internal scratch']
  %s0 = inlined_call_operand.vmem [shape: bf16[128,128], index: 0, kind: input, shape index: {}]
  %s1 = inlined_call_operand.vmem [shape: bf16[128,128], index: 1, kind: input, shape index: {}]
  %s2 = inlined_call_operand.vmem [shape: f32[128,1], index: 2, kind: input, shape index: {}]
  %s3 = inlined_call_operand.vmem [shape: bf16[128,128], index: 3, kind: output, shape index: {}]
  %s4 = sld [smem:[#allocation0]]
  $region45: #{gcn_model_forward.5} parent=0
    _
  %s6 = ssub.s32 1, %s4
  %s7 = scalar_select 0, %s6, %s4
  loop: start=0, step=1, limit=4
  $region2: #{gcn_model_forward.5} parent=0 // loop_pre_header
    _
  $region3: #{gcn_model_forward.5} parent=0 // loop_header
    %s9 = sphi 0, %s13
    %p10 = scmp.ge.s32.totalorder %s9, 4
    %s19 = sphi 0, %s21
    %s22 = sphi 0, %s19
    %s23 = sphi 0, %s22
    %s39 = sphi 0, %s23
    %s43 = sphi 0, %s43
    %s45 = sphi 0, %s43
    %s46 = sphi 0, %s45
    %s60 = sphi 0, %s46
    %s66 = sphi 0, %s68
    %s69 = sphi 0, %s66
    %s70 = sphi 0, %s69
    %s86 = sphi 0, %s70
    %s92 = sphi 0, %s94
    %s95 = sphi 0, %s92
    %s96 = sphi 0, %s95
    %s112 = sphi 0, %s96
  $region4: #{gcn_model_forward.5} parent=0 // loop_header_branch
    %12 = sbr.rel (%p10) target = $region8
  $region5: #{gcn_model_forward.5} parent=0 // loop_body
    %s14 = ssub.s32 %s9, 1
    %s15 = ssub.s32 %s9, 2
    %s16 = sadd.s32 %s9, 1
    %s17 = ssub.s32 %s9, %s16
    %p18 = scmp.eq.s32.totalorder %s17, 0
    %s20 = sadd.s32 %s19, 1
    %s21 = scalar_select %p18, %s19, %s20
    %p24 = pneg %p18
    %p25 = scmp.eq.s32.totalorder %s9, 1
    %p26 = por %p24, %p25
    %p27 = scmp.ne.s32.totalorder %s19, %s22
    %p28 = scmp.eq.s32.totalorder %s9, 0
    %p29 = por %p27, %p28
    %p30 = scmp.ne.s32.totalorder %s19, %s22
    %p31 = scmp.eq.s32.totalorder %s14, 1
    %p32 = por %p30, %p31
    %p33 = scmp.ne.s32.totalorder %s22, %s23
    %p34 = scmp.eq.s32.totalorder %s14, 0
    %p35 = por %p33, %p34
    %p36 = scmp.ne.s32.totalorder %s22, %s23
    %p37 = scmp.eq.s32.totalorder %s15, 1
    %p38 = por %p36, %p37
    %p40 = scmp.ne.s32.totalorder %s23, %s39
    %p41 = scmp.eq.s32.totalorder %s15, 0
    %p42 = por %p40, %p41
    %s44 = sadd.s32 %s43, 1
    %p47 = scmp.eq.s32.totalorder %s9, 1
    %p48 = scmp.ne.s32.totalorder %s43, %s45
    %p49 = scmp.eq.s32.totalorder %s9, 0
    %p50 = por %p48, %p49
    %p51 = scmp.ne.s32.totalorder %s43, %s45
    %p52 = scmp.eq.s32.totalorder %s14, 1
    %p53 = por %p51, %p52
    %p54 = scmp.ne.s32.totalorder %s45, %s46
    %p55 = scmp.eq.s32.totalorder %s14, 0
    %p56 = por %p54, %p55
    %p57 = scmp.ne.s32.totalorder %s45, %s46
    %p58 = scmp.eq.s32.totalorder %s15, 1
    %p59 = por %p57, %p58
    %p61 = scmp.ne.s32.totalorder %s46, %s60
    %p62 = scmp.eq.s32.totalorder %s15, 0
    %p63 = por %p61, %p62
    %s64 = ssub.s32 %s9, %s16
    %p65 = scmp.eq.s32.totalorder %s64, 0
    %s67 = sadd.s32 %s66, 1
    %s68 = scalar_select %p65, %s66, %s67
    %p71 = pneg %p65
    %p72 = scmp.eq.s32.totalorder %s9, 1
    %p73 = por %p71, %p72
    %p74 = scmp.ne.s32.totalorder %s66, %s69
    %p75 = scmp.eq.s32.totalorder %s9, 0
    %p76 = por %p74, %p75
    %p77 = scmp.ne.s32.totalorder %s66, %s69
    %p78 = scmp.eq.s32.totalorder %s14, 1
    %p79 = por %p77, %p78
    %p80 = scmp.ne.s32.totalorder %s69, %s70
    %p81 = scmp.eq.s32.totalorder %s14, 0
    %p82 = por %p80, %p81
    %p83 = scmp.ne.s32.totalorder %s69, %s70
    %p84 = scmp.eq.s32.totalorder %s15, 1
    %p85 = por %p83, %p84
    %p87 = scmp.ne.s32.totalorder %s70, %s86
    %p88 = scmp.eq.s32.totalorder %s15, 0
    %p89 = por %p87, %p88
    %s90 = ssub.s32 %s9, %s16
    %p91 = scmp.eq.s32.totalorder %s90, 0
    %s93 = sadd.s32 %s92, 1
    %s94 = scalar_select %p91, %s92, %s93
    %p97 = pneg %p91
    %p98 = scmp.eq.s32.totalorder %s9, 1
    %p99 = por %p97, %p98
    %p100 = scmp.ne.s32.totalorder %s92, %s95
    %p101 = scmp.eq.s32.totalorder %s9, 0
    %p102 = por %p100, %p101
    %p103 = scmp.ne.s32.totalorder %s92, %s95
    %p104 = scmp.eq.s32.totalorder %s14, 1
    %p105 = por %p103, %p104
    %p106 = scmp.ne.s32.totalorder %s95, %s96
    %p107 = scmp.eq.s32.totalorder %s14, 0
    %p108 = por %p106, %p107
    %p109 = scmp.ne.s32.totalorder %s95, %s96
    %p110 = scmp.eq.s32.totalorder %s15, 1
    %p111 = por %p109, %p110
    %p113 = scmp.ne.s32.totalorder %s96, %s112
    %p114 = scmp.eq.s32.totalorder %s15, 0
    %p115 = por %p113, %p114
    %p116 = scmp.le.s32.totalorder 1, %s9
    %p117 = scmp.lt.s32.totalorder %s9, 3
    %p118 = pnand %p116, %p117
    %p119 = pneg %p118
    // Predicated region
    $region9: #{gcn_model_forward.5} parent=5 // pred_check
      _
    $region10: #{gcn_model_forward.5} parent=5 // pred_check_branch
      %121 = sbr.rel (%p118) target = $region12
    $region11: #{gcn_model_forward.5} parent=5 // pred_region
      %s122 = ssub.s32 %s9, 1
      // Predicated region
      $region13: #{gcn_model_forward.5} parent=11 // pred_check
        %p123 = pneg %p56
      $region14: #{gcn_model_forward.5} parent=11 // pred_check_branch
        %125 = sbr.rel (%p123) target = $region16
      $region15: #{gcn_model_forward.5} parent=11 // pred_region
        _
      $region16: #{gcn_model_forward.5} parent=11 // pred_fallthru
        _
    $region12: #{gcn_model_forward.5} parent=5 // pred_fallthru
      _
    %p126 = scmp.lt.s32.totalorder %s9, 2
    // Predicated region
    $region17: #{gcn_model_forward.5} parent=5 // pred_check
      %p127 = pneg %p126
    $region18: #{gcn_model_forward.5} parent=5 // pred_check_branch
      %129 = sbr.rel (%p127) target = $region20
    $region19: #{gcn_model_forward.5} parent=5 // pred_region
      // Predicated region
      $region21: #{gcn_model_forward.5} parent=19 // pred_check
        %p130 = pneg %p29
      $region22: #{gcn_model_forward.5} parent=19 // pred_check_branch
        %132 = sbr.rel (%p130) target = $region24
      $region23: #{gcn_model_forward.5} parent=19 // pred_region
        %s133 = smul.u32 8, %s9
        %p134 = scmp.lt.s32.totalorder %s133, 15
        %s135 = scalar_select %p134, %s133, 15
        %s136 = smul.addr %s135, 4
        %s137 = scalar_lea.vmem %s0, %s136
        %s138 = smul.u32 8, %s9
      $region24: #{gcn_model_forward.5} parent=19 // pred_fallthru
        _
      // Predicated region
      $region25: #{gcn_model_forward.5} parent=19 // pred_check
        %p139 = pneg %p76
      $region26: #{gcn_model_forward.5} parent=19 // pred_check_branch
        %141 = sbr.rel (%p139) target = $region28
      $region27: #{gcn_model_forward.5} parent=19 // pred_region
        %s142 = smul.u32 8, %s9
        %p143 = scmp.lt.s32.totalorder %s142, 15
        %s144 = scalar_select %p143, %s142, 15
        %s145 = smul.addr %s144, 8
        %s146 = scalar_lea.vmem %s2, %s145
        %s147 = smul.u32 8, %s9
      $region28: #{gcn_model_forward.5} parent=19 // pred_fallthru
        _
    $region20: #{gcn_model_forward.5} parent=5 // pred_fallthru
      _
    %p148 = scmp.le.s32.totalorder 1, %s9
    %p149 = scmp.lt.s32.totalorder %s9, 3
    %p150 = pnand %p148, %p149
    %p151 = pneg %p150
    // Predicated region
    $region29: #{gcn_model_forward.5} parent=5 // pred_check
      _
    $region30: #{gcn_model_forward.5} parent=5 // pred_check_branch
      %153 = sbr.rel (%p150) target = $region32
    $region31: #{gcn_model_forward.5} parent=5 // pred_region
      %s154 = ssub.s32 %s9, 1
      %s155 = smul.u32 8, %s14
      %p156 = scmp.lt.s32.totalorder %s155, 15
      %s157 = scalar_select %p156, %s155, 15
      %s158 = smul.addr %s157, 4
      %s159 = scalar_lea.vmem %s0, %s158
      %p160 = pneg %p35
      %p161 = pneg %p32
      %p162 = pneg %p56
      %p163 = pneg %p53
      %s164 = smul.u32 8, %s14
      %p165 = scmp.lt.s32.totalorder %s164, 15
      %s166 = scalar_select %p165, %s164, 15
      %s167 = smul.addr %s166, 8
      %s168 = scalar_lea.vmem %s2, %s167
      %p169 = pneg %p82
      %p170 = pneg %p79
      %p171 = pneg %p108
      %p172 = pneg %p105
      %s173 = smul.u32 8, %s14
      %p174 = scmp.lt.s32.totalorder %s173, 15
      %s175 = scalar_select %p174, %s173, 15
      %s176 = smul.addr %s175, 4
      %s177 = scalar_lea.vmem %s3, %s176
      %s178 = smul.u32 8, %s14
      %p179 = scmp.lt.s32.totalorder %s178, 15
      %s180 = scalar_select %p179, %s178, 15
      %s181 = smul.addr %s180, 4
      %s182 = scalar_lea.vmem %s0, %s181
      %s183 = smul.u32 8, %s14
      %s184 = smul.u32 8, %s14
      %p185 = scmp.lt.s32.totalorder %s184, 15
      %s186 = scalar_select %p185, %s184, 15
      %s187 = smul.addr %s186, 8
      %s188 = scalar_lea.vmem %s2, %s187
      %s189 = smul.u32 8, %s14
      %s190 = smul.u32 8, %s14
      %p191 = scmp.lt.s32.totalorder %s190, 15
      %s192 = scalar_select %p191, %s190, 15
      %s193 = smul.addr %s192, 4
      %s194 = scalar_lea.vmem %s3, %s193
      %s195 = smul.u32 8, %s14
      %v197 = vld [vmem:[%s182] sm:$0xf]
      %v198 = vld [vmem:[%s182 + $0x4] sm:$0xf]
      %v199 = vld [vmem:[%s182 + $0x8] sm:$0xf]
      %v200 = vld [vmem:[%s182 + $0xc] sm:$0xf]
      %v201 = vld [vmem:[%s182 + $0x10] sm:$0xf]
      %v202 = vld [vmem:[%s182 + $0x14] sm:$0xf]
      %v203 = vld [vmem:[%s182 + $0x18] sm:$0xf]
      %v204 = vld [vmem:[%s182 + $0x1c] sm:$0xf]
      %v205 = vld [vmem:[%s1] sm:$0xf]
      %v206 = vld [vmem:[%s1 + $0x4] sm:$0xf]
      %v207 = vld [vmem:[%s1 + $0x8] sm:$0xf]
      %v208 = vld [vmem:[%s1 + $0xc] sm:$0xf]
      %v209 = vld [vmem:[%s1 + $0x10] sm:$0xf]
      %v210 = vld [vmem:[%s1 + $0x14] sm:$0xf]
      %v211 = vld [vmem:[%s1 + $0x18] sm:$0xf]
      %v212 = vld [vmem:[%s1 + $0x1c] sm:$0xf]
      %v213 = vld [vmem:[%s1 + $0x20] sm:$0xf]
      %v214 = vld [vmem:[%s1 + $0x24] sm:$0xf]
      %v215 = vld [vmem:[%s1 + $0x28] sm:$0xf]
      %v216 = vld [vmem:[%s1 + $0x2c] sm:$0xf]
      %v217 = vld [vmem:[%s1 + $0x30] sm:$0xf]
      %v218 = vld [vmem:[%s1 + $0x34] sm:$0xf]
      %v219 = vld [vmem:[%s1 + $0x38] sm:$0xf]
      %v220 = vld [vmem:[%s1 + $0x3c] sm:$0xf]
      %v229 = vunpack.c.l.b16 %v197
      %v230 = vunpack.c.l.b16 %v198
      %v231 = vunpack.c.l.b16 %v199
      %v232 = vunpack.c.l.b16 %v200
      %v233 = vunpack.c.l.b16 %v201
      %v234 = vunpack.c.l.b16 %v202
      %v235 = vunpack.c.l.b16 %v203
      %v236 = vunpack.c.l.b16 %v204
      %v237 = vpack.c.b16 %v230, %v229
      %v238 = vpack.c.b16 %v232, %v231
      %v239 = vpack.c.b16 %v234, %v233
      %v240 = vpack.c.b16 %v236, %v235
      %v261 = vunpack.c.l.b16 %v205
      %v262 = vunpack.c.l.b16 %v206
      %v263 = vunpack.c.l.b16 %v207
      %v264 = vunpack.c.l.b16 %v208
      %v265 = vunpack.c.l.b16 %v209
      %v266 = vunpack.c.l.b16 %v210
      %v267 = vunpack.c.l.b16 %v211
      %v268 = vunpack.c.l.b16 %v212
      %v269 = vunpack.c.l.b16 %v213
      %v270 = vunpack.c.l.b16 %v214
      %v271 = vunpack.c.l.b16 %v215
      %v272 = vunpack.c.l.b16 %v216
      %v273 = vunpack.c.l.b16 %v217
      %v274 = vunpack.c.l.b16 %v218
      %v275 = vunpack.c.l.b16 %v219
      %v276 = vunpack.c.l.b16 %v220
      %v277 = vpack.c.b16 %v262, %v261
      %v278 = vpack.c.b16 %v264, %v263
      %v279 = vpack.c.b16 %v266, %v265
      %v280 = vpack.c.b16 %v268, %v267
      %v281 = vpack.c.b16 %v270, %v269
      %v282 = vpack.c.b16 %v272, %v271
      %v283 = vpack.c.b16 %v274, %v273
      %v284 = vpack.c.b16 %v276, %v275
      %293 = vmatprep.subr.bf16.mxu0 0
      %294 = vmatpush1.bf16.msra.mxu0 %v284
      %295 = vmatprep.subr.bf16.mxu0 0
      %296 = vmatpush1.bf16.msra.mxu0 %v283
      %297 = vmatprep.subr.bf16.mxu0 0
      %298 = vmatpush1.bf16.msra.mxu0 %v282
      %299 = vmatprep.subr.bf16.mxu0 0
      %300 = vmatpush1.bf16.msra.mxu0 %v281
      %301 = vmatprep.subr.bf16.mxu0 0
      %302 = vmatpush1.bf16.msra.mxu0 %v280
      %303 = vmatprep.subr.bf16.mxu0 0
      %304 = vmatpush1.bf16.msra.mxu0 %v279
      %305 = vmatprep.subr.bf16.mxu0 0
      %306 = vmatpush1.bf16.msra.mxu0 %v278
      %307 = vmatprep.subr.bf16.mxu0 0
      %308 = vmatpush1.bf16.msra.mxu0 %v277
      %309 = vmatprep.subr.bf16.mxu0 0
      %310 = vmatpush2.bf16.msra.mxu0 0
      %311 = vmatprep.subr.bf16.mxu0 0
      %312 = vmatpush2.bf16.msra.mxu0 0
      %313 = vmatprep.subr.bf16.mxu0 0
      %314 = vmatpush2.bf16.msra.mxu0 0
      %315 = vmatprep.subr.bf16.mxu0 0
      %316 = vmatpush2.bf16.msra.mxu0 0
      %317 = vmatprep.subr.bf16.mxu0 0
      %318 = vmatpush2.bf16.msra.mxu0 0
      %319 = vmatprep.subr.bf16.mxu0 0
      %320 = vmatpush2.bf16.msra.mxu0 0
      %321 = vmatprep.subr.bf16.mxu0 0
      %322 = vmatpush2.bf16.msra.mxu0 0
      %323 = vmatprep.subr.bf16.mxu0 0
      %324 = vmatpush2.bf16.msra.mxu0 0
      %325 = vmatprep.mubr.bf16.mxu0 0
      %326 = vmatmul.mubr.bf16.gmra.mxu0 %v237
      %v327 = vpop.f32.mrf.mxu0
      %v328 = vadd.f32 0.0, %v327
      %v329 = vpop.f32.mrf.mxu0
      %v330 = vpop.f32.mrf.mxu0
      %v331 = vadd.f32 0.0, %v330
      %v332 = vpop.f32.mrf.mxu0
      %333 = vmatprep.mubr.bf16.mxu0 0
      %334 = vmatmul.mubr.bf16.gmra.mxu0 %v238
      %v335 = vpop.f32.mrf.mxu0
      %v336 = vadd.f32 0.0, %v335
      %v337 = vpop.f32.mrf.mxu0
      %v338 = vpop.f32.mrf.mxu0
      %v339 = vadd.f32 0.0, %v338
      %v340 = vpop.f32.mrf.mxu0
      %341 = vmatprep.mubr.bf16.mxu0 0
      %342 = vmatmul.mubr.bf16.gmra.mxu0 %v239
      %v343 = vpop.f32.mrf.mxu0
      %v344 = vadd.f32 0.0, %v343
      %v345 = vpop.f32.mrf.mxu0
      %v346 = vpop.f32.mrf.mxu0
      %v347 = vadd.f32 0.0, %v346
      %v348 = vpop.f32.mrf.mxu0
      %349 = vmatprep.mubr.bf16.mxu0 0
      %350 = vmatmul.mubr.bf16.gmra.mxu0 %v240
      %v351 = vpop.f32.mrf.mxu0
      %v352 = vadd.f32 0.0, %v351
      %v353 = vpop.f32.mrf.mxu0
      %v354 = vpop.f32.mrf.mxu0
      %v355 = vadd.f32 0.0, %v354
      %v356 = vpop.f32.mrf.mxu0
      %357 = vdwg.mxu0
      %v358 = vld [vmem:[%s188] sm:$0xff]
      %v359 = vld [vmem:[%s188 + $0x8] sm:$0xff]
      %v360 = vld [vmem:[%s188 + $0x10] sm:$0xff]
      %v361 = vld [vmem:[%s188 + $0x18] sm:$0xff]
      %v362 = vld [vmem:[%s188 + $0x20] sm:$0xff]
      %v363 = vld [vmem:[%s188 + $0x28] sm:$0xff]
      %v364 = vld [vmem:[%s188 + $0x30] sm:$0xff]
      %v365 = vld [vmem:[%s188 + $0x38] sm:$0xff]
      %367 = vset.pattern.permute.xlu0 0
      %368 = vperm.xlu0 %367, %v358
      %v369 = vpop.permute.xlu0 %368
      %372 = vset.pattern.permute.xlu0 0
      %373 = vperm.xlu0 %372, %v359
      %v374 = vpop.permute.xlu0 %373
      %377 = vset.pattern.permute.xlu0 0
      %378 = vperm.xlu0 %377, %v360
      %v379 = vpop.permute.xlu0 %378
      %382 = vset.pattern.permute.xlu0 0
      %383 = vperm.xlu0 %382, %v361
      %v384 = vpop.permute.xlu0 %383
      %387 = vset.pattern.permute.xlu0 0
      %388 = vperm.xlu0 %387, %v362
      %v389 = vpop.permute.xlu0 %388
      %392 = vset.pattern.permute.xlu0 0
      %393 = vperm.xlu0 %392, %v363
      %v394 = vpop.permute.xlu0 %393
      %397 = vset.pattern.permute.xlu0 0
      %398 = vperm.xlu0 %397, %v364
      %v399 = vpop.permute.xlu0 %398
      %402 = vset.pattern.permute.xlu0 0
      %403 = vperm.xlu0 %402, %v365
      %v404 = vpop.permute.xlu0 %403
      %v406 = vmul.f32 %v328, %v369
      %v407 = vmul.f32 %v331, %v374
      %v408 = vmul.f32 %v336, %v379
      %v409 = vmul.f32 %v339, %v384
      %v410 = vmul.f32 %v344, %v389
      %v411 = vmul.f32 %v347, %v394
      %v412 = vmul.f32 %v352, %v399
      %v413 = vmul.f32 %v355, %v404
      %v414 = vpack.c.bf16 %v407, %v406
      %v415 = vpack.c.bf16 %v409, %v408
      %v416 = vpack.c.bf16 %v411, %v410
      %v417 = vpack.c.bf16 %v413, %v412
      %v422 = vunpack.c.l.b16 %v414
      %v423 = vunpack.c.h.b16 %v414
      %v424 = vunpack.c.l.b16 %v415
      %v425 = vunpack.c.h.b16 %v415
      %v426 = vunpack.c.l.b16 %v416
      %v427 = vunpack.c.h.b16 %v416
      %v428 = vunpack.c.l.b16 %v417
      %v429 = vunpack.c.h.b16 %v417
      %v430 = vpack.c.b16 %v422, %v422
      %v431 = vpack.c.b16 %v423, %v423
      %v432 = vpack.c.b16 %v424, %v424
      %v433 = vpack.c.b16 %v425, %v425
      %v434 = vpack.c.b16 %v426, %v426
      %v435 = vpack.c.b16 %v427, %v427
      %v436 = vpack.c.b16 %v428, %v428
      %v437 = vpack.c.b16 %v429, %v429
      %446 = vst [vmem:[%s194] sm:$0xf] %v430
      %447 = vst [vmem:[%s194 + $0x4] sm:$0xf] %v431
      %448 = vst [vmem:[%s194 + $0x8] sm:$0xf] %v432
      %449 = vst [vmem:[%s194 + $0xc] sm:$0xf] %v433
      %450 = vst [vmem:[%s194 + $0x10] sm:$0xf] %v434
      %451 = vst [vmem:[%s194 + $0x14] sm:$0xf] %v435
      %452 = vst [vmem:[%s194 + $0x18] sm:$0xf] %v436
      %453 = vst [vmem:[%s194 + $0x1c] sm:$0xf] %v437
      %s454 = smul.u32 8, %s14
      %p455 = scmp.lt.s32.totalorder %s454, 15
      %s456 = scalar_select %p455, %s454, 15
      %s457 = smul.addr %s456, 4
      %s458 = scalar_lea.vmem %s3, %s457
      // Predicated region
      $region33: #{gcn_model_forward.5} parent=31 // pred_check
        %p459 = pneg %p105
      $region34: #{gcn_model_forward.5} parent=31 // pred_check_branch
        %461 = sbr.rel (%p459) target = $region36
      $region35: #{gcn_model_forward.5} parent=31 // pred_region
        %s462 = smul.u32 8, %s14
      $region36: #{gcn_model_forward.5} parent=31 // pred_fallthru
        _
    $region32: #{gcn_model_forward.5} parent=5 // pred_fallthru
      _
    %p463 = scmp.le.s32.totalorder 2, %s9
    // Predicated region
    $region37: #{gcn_model_forward.5} parent=5 // pred_check
      %p464 = pneg %p463
    $region38: #{gcn_model_forward.5} parent=5 // pred_check_branch
      %466 = sbr.rel (%p464) target = $region40
    $region39: #{gcn_model_forward.5} parent=5 // pred_region
      %s467 = ssub.s32 %s9, 2
      // Predicated region
      $region41: #{gcn_model_forward.5} parent=39 // pred_check
        %p468 = pneg %p111
      $region42: #{gcn_model_forward.5} parent=39 // pred_check_branch
        %470 = sbr.rel (%p468) target = $region44
      $region43: #{gcn_model_forward.5} parent=39 // pred_region
        %s471 = smul.u32 8, %s15
        %p472 = scmp.lt.s32.totalorder %s471, 15
        %s473 = scalar_select %p472, %s471, 15
        %s474 = smul.addr %s473, 4
        %s475 = scalar_lea.vmem %s3, %s474
      $region44: #{gcn_model_forward.5} parent=39 // pred_fallthru
        _
    $region40: #{gcn_model_forward.5} parent=5 // pred_fallthru
      _
  $region6: #{gcn_model_forward.5} parent=0 // loop_footer
    %s13 = sadd.s32 1, %s9
  $region7: #{gcn_model_forward.5} parent=0 // loop_footer_branch
    %8 = sbr.rel target = $region3
  $region8: #{gcn_model_forward.5} parent=0 // loop_exit
    _

// kernel: gcn_model_forward.8
$region0: #{gcn_model_forward.8}
  #allocation0 [shape = 'u32[]', space=smem, size = 0x4, offset = 0x4, fixed_abs, tag = 'smem constant byte address 0x4 - core index']
  #allocation1 [shape = 'u32[144,128]{1,0:T(1,128)}', space=vmem, size = 0x12000, scoped, tag = 'internal scratch']
  #allocation2 [shape = 'f32[64,128]{1,0:T(8,128)}', space=vmem, size = 0x8000, scoped, tag = 'scratch operand']
  %s0 = inlined_call_operand.vmem [shape: s8[128,128], index: 0, kind: input, shape index: {}]
  %s1 = inlined_call_operand.vmem [shape: bf16[128,128], index: 1, kind: input, shape index: {}]
  %s2 = inlined_call_operand.vmem [shape: f32[128,1], index: 2, kind: input, shape index: {}]
  %s3 = inlined_call_operand.vmem [shape: f32[1,128], index: 3, kind: input, shape index: {}]
  %s4 = inlined_call_operand.vmem [shape: bf16[128,128], index: 4, kind: output, shape index: {}]
  %s5 = sld [smem:[#allocation0]]
  $region57: #{gcn_model_forward.8} parent=0
    _
  %s7 = ssub.s32 1, %s5
  %s8 = scalar_select 0, %s7, %s5
  loop: start=0, step=1, limit=4
  $region2: #{gcn_model_forward.8} parent=0 // loop_pre_header
    _
  $region3: #{gcn_model_forward.8} parent=0 // loop_header
    %s10 = sphi 0, %s14
    %p11 = scmp.ge.s32.totalorder %s10, 4
    %s17 = sphi 0, %s29
    %s18 = sphi 0, %s25
    %s19 = sphi 0, %s17
    %s20 = sphi 0, %s18
    %s21 = sphi 0, %s19
    %s22 = sphi 0, %s20
    %s34 = sphi 0, %s36
    %s37 = sphi 0, %s34
    %s38 = sphi 0, %s37
    %s54 = sphi 0, %s38
    %s58 = sphi 0, %s58
    %s60 = sphi 0, %s58
    %s61 = sphi 0, %s60
    %s75 = sphi 0, %s61
    %s81 = sphi 0, %s83
    %s84 = sphi 0, %s81
    %s85 = sphi 0, %s84
    %s101 = sphi 0, %s85
    %s105 = sphi 0, %s105
    %s107 = sphi 0, %s105
    %s108 = sphi 0, %s107
    %s122 = sphi 0, %s108
    %s128 = sphi 0, %s130
    %s131 = sphi 0, %s128
    %s132 = sphi 0, %s131
    %s148 = sphi 0, %s132
  $region4: #{gcn_model_forward.8} parent=0 // loop_header_branch
    %13 = sbr.rel (%p11) target = $region8
  $region5: #{gcn_model_forward.8} parent=0 // loop_body
    %s15 = ssub.s32 %s10, 1
    %s16 = ssub.s32 %s10, 2
    %s23 = sadd.s32 1, %s18
    %p24 = scmp.ge.s32.totalorder %s23, 1
    %s25 = scalar_select %p24, 0, %s23
    %s26 = sadd.s32 1, %s17
    %s27 = scalar_select %p24, %s26, %s17
    %p28 = scmp.ge.s32.totalorder %s27, 2
    %s29 = scalar_select %p28, 0, %s27
    %s30 = ssub.s32 %s17, %s29
    %s31 = ssub.s32 %s18, %s25
    %s32 = sor.u32 %s30, %s31
    %p33 = scmp.eq.s32.totalorder %s32, 0
    %s35 = sadd.s32 %s34, 1
    %s36 = scalar_select %p33, %s34, %s35
    %p39 = pneg %p33
    %p40 = scmp.eq.s32.totalorder %s10, 1
    %p41 = por %p39, %p40
    %p42 = scmp.ne.s32.totalorder %s34, %s37
    %p43 = scmp.eq.s32.totalorder %s10, 0
    %p44 = por %p42, %p43
    %p45 = scmp.ne.s32.totalorder %s34, %s37
    %p46 = scmp.eq.s32.totalorder %s15, 1
    %p47 = por %p45, %p46
    %p48 = scmp.ne.s32.totalorder %s37, %s38
    %p49 = scmp.eq.s32.totalorder %s15, 0
    %p50 = por %p48, %p49
    %p51 = scmp.ne.s32.totalorder %s37, %s38
    %p52 = scmp.eq.s32.totalorder %s16, 1
    %p53 = por %p51, %p52
    %p55 = scmp.ne.s32.totalorder %s38, %s54
    %p56 = scmp.eq.s32.totalorder %s16, 0
    %p57 = por %p55, %p56
    %s59 = sadd.s32 %s58, 1
    %p62 = scmp.eq.s32.totalorder %s10, 1
    %p63 = scmp.ne.s32.totalorder %s58, %s60
    %p64 = scmp.eq.s32.totalorder %s10, 0
    %p65 = por %p63, %p64
    %p66 = scmp.ne.s32.totalorder %s58, %s60
    %p67 = scmp.eq.s32.totalorder %s15, 1
    %p68 = por %p66, %p67
    %p69 = scmp.ne.s32.totalorder %s60, %s61
    %p70 = scmp.eq.s32.totalorder %s15, 0
    %p71 = por %p69, %p70
    %p72 = scmp.ne.s32.totalorder %s60, %s61
    %p73 = scmp.eq.s32.totalorder %s16, 1
    %p74 = por %p72, %p73
    %p76 = scmp.ne.s32.totalorder %s61, %s75
    %p77 = scmp.eq.s32.totalorder %s16, 0
    %p78 = por %p76, %p77
    %s79 = ssub.s32 %s17, %s29
    %p80 = scmp.eq.s32.totalorder %s79, 0
    %s82 = sadd.s32 %s81, 1
    %s83 = scalar_select %p80, %s81, %s82
    %p86 = pneg %p80
    %p87 = scmp.eq.s32.totalorder %s10, 1
    %p88 = por %p86, %p87
    %p89 = scmp.ne.s32.totalorder %s81, %s84
    %p90 = scmp.eq.s32.totalorder %s10, 0
    %p91 = por %p89, %p90
    %p92 = scmp.ne.s32.totalorder %s81, %s84
    %p93 = scmp.eq.s32.totalorder %s15, 1
    %p94 = por %p92, %p93
    %p95 = scmp.ne.s32.totalorder %s84, %s85
    %p96 = scmp.eq.s32.totalorder %s15, 0
    %p97 = por %p95, %p96
    %p98 = scmp.ne.s32.totalorder %s84, %s85
    %p99 = scmp.eq.s32.totalorder %s16, 1
    %p100 = por %p98, %p99
    %p102 = scmp.ne.s32.totalorder %s85, %s101
    %p103 = scmp.eq.s32.totalorder %s16, 0
    %p104 = por %p102, %p103
    %s106 = sadd.s32 %s105, 1
    %p109 = scmp.eq.s32.totalorder %s10, 1
    %p110 = scmp.ne.s32.totalorder %s105, %s107
    %p111 = scmp.eq.s32.totalorder %s10, 0
    %p112 = por %p110, %p111
    %p113 = scmp.ne.s32.totalorder %s105, %s107
    %p114 = scmp.eq.s32.totalorder %s15, 1
    %p115 = por %p113, %p114
    %p116 = scmp.ne.s32.totalorder %s107, %s108
    %p117 = scmp.eq.s32.totalorder %s15, 0
    %p118 = por %p116, %p117
    %p119 = scmp.ne.s32.totalorder %s107, %s108
    %p120 = scmp.eq.s32.totalorder %s16, 1
    %p121 = por %p119, %p120
    %p123 = scmp.ne.s32.totalorder %s108, %s122
    %p124 = scmp.eq.s32.totalorder %s16, 0
    %p125 = por %p123, %p124
    %s126 = ssub.s32 %s17, %s29
    %p127 = scmp.eq.s32.totalorder %s126, 0
    %s129 = sadd.s32 %s128, 1
    %s130 = scalar_select %p127, %s128, %s129
    %p133 = pneg %p127
    %p134 = scmp.eq.s32.totalorder %s10, 1
    %p135 = por %p133, %p134
    %p136 = scmp.ne.s32.totalorder %s128, %s131
    %p137 = scmp.eq.s32.totalorder %s10, 0
    %p138 = por %p136, %p137
    %p139 = scmp.ne.s32.totalorder %s128, %s131
    %p140 = scmp.eq.s32.totalorder %s15, 1
    %p141 = por %p139, %p140
    %p142 = scmp.ne.s32.totalorder %s131, %s132
    %p143 = scmp.eq.s32.totalorder %s15, 0
    %p144 = por %p142, %p143
    %p145 = scmp.ne.s32.totalorder %s131, %s132
    %p146 = scmp.eq.s32.totalorder %s16, 1
    %p147 = por %p145, %p146
    %p149 = scmp.ne.s32.totalorder %s132, %s148
    %p150 = scmp.eq.s32.totalorder %s16, 0
    %p151 = por %p149, %p150
    %p152 = scmp.le.s32.totalorder 1, %s10
    %p153 = scmp.lt.s32.totalorder %s10, 3
    %p154 = pnand %p152, %p153
    %p155 = pneg %p154
    // Predicated region
    $region9: #{gcn_model_forward.8} parent=5 // pred_check
      _
    $region10: #{gcn_model_forward.8} parent=5 // pred_check_branch
      %157 = sbr.rel (%p154) target = $region12
    $region11: #{gcn_model_forward.8} parent=5 // pred_region
      %s158 = ssub.s32 %s10, 1
      // Predicated region
      $region13: #{gcn_model_forward.8} parent=11 // pred_check
        %p159 = pneg %p71
      $region14: #{gcn_model_forward.8} parent=11 // pred_check_branch
        %161 = sbr.rel (%p159) target = $region16
      $region15: #{gcn_model_forward.8} parent=11 // pred_region
        _
      $region16: #{gcn_model_forward.8} parent=11 // pred_fallthru
        _
      // Predicated region
      $region17: #{gcn_model_forward.8} parent=11 // pred_check
        %p162 = pneg %p118
      $region18: #{gcn_model_forward.8} parent=11 // pred_check_branch
        %164 = sbr.rel (%p162) target = $region20
      $region19: #{gcn_model_forward.8} parent=11 // pred_region
        _
      $region20: #{gcn_model_forward.8} parent=11 // pred_fallthru
        _
    $region12: #{gcn_model_forward.8} parent=5 // pred_fallthru
      _
    %p165 = scmp.lt.s32.totalorder %s10, 2
    // Predicated region
    $region21: #{gcn_model_forward.8} parent=5 // pred_check
      %p166 = pneg %p165
    $region22: #{gcn_model_forward.8} parent=5 // pred_check_branch
      %168 = sbr.rel (%p166) target = $region24
    $region23: #{gcn_model_forward.8} parent=5 // pred_region
      // Predicated region
      $region25: #{gcn_model_forward.8} parent=23 // pred_check
        %p169 = pneg %p44
      $region26: #{gcn_model_forward.8} parent=23 // pred_check_branch
        %171 = sbr.rel (%p169) target = $region28
      $region27: #{gcn_model_forward.8} parent=23 // pred_region
        %s172 = smul.u32 8, %s17
        %p173 = scmp.lt.s32.totalorder %s172, 15
        %s174 = scalar_select %p173, %s172, 15
        %p175 = scmp.lt.s32.totalorder %s18, 0
        %s176 = scalar_select %p175, %s18, 0
        %s177 = sadd.s32 %s176, %s174
        %s178 = smul.addr %s177, 2
        %s179 = scalar_lea.vmem %s0, %s178
        %s180 = smul.u32 8, %s17
      $region28: #{gcn_model_forward.8} parent=23 // pred_fallthru
        _
      // Predicated region
      $region29: #{gcn_model_forward.8} parent=23 // pred_check
        %p181 = pneg %p91
      $region30: #{gcn_model_forward.8} parent=23 // pred_check_branch
        %183 = sbr.rel (%p181) target = $region32
      $region31: #{gcn_model_forward.8} parent=23 // pred_region
        %s184 = smul.u32 8, %s17
        %p185 = scmp.lt.s32.totalorder %s184, 15
        %s186 = scalar_select %p185, %s184, 15
        %s187 = smul.addr %s186, 8
        %s188 = scalar_lea.vmem %s2, %s187
        %s189 = smul.u32 8, %s17
      $region32: #{gcn_model_forward.8} parent=23 // pred_fallthru
        _
    $region24: #{gcn_model_forward.8} parent=5 // pred_fallthru
      _
    %p190 = scmp.le.s32.totalorder 1, %s10
    %p191 = scmp.lt.s32.totalorder %s10, 3
    %p192 = pnand %p190, %p191
    %p193 = pneg %p192
    // Predicated region
    $region33: #{gcn_model_forward.8} parent=5 // pred_check
      _
    $region34: #{gcn_model_forward.8} parent=5 // pred_check_branch
      %195 = sbr.rel (%p192) target = $region36
    $region35: #{gcn_model_forward.8} parent=5 // pred_region
      %s196 = ssub.s32 %s10, 1
      %s197 = smul.u32 8, %s19
      %p198 = scmp.lt.s32.totalorder %s197, 15
      %s199 = scalar_select %p198, %s197, 15
      %p200 = scmp.lt.s32.totalorder %s20, 0
      %s201 = scalar_select %p200, %s20, 0
      %s202 = sadd.s32 %s201, %s199
      %s203 = smul.addr %s202, 2
      %s204 = scalar_lea.vmem %s0, %s203
      %p205 = pneg %p50
      %p206 = pneg %p47
      %p207 = pneg %p71
      %p208 = pneg %p68
      %s209 = smul.u32 8, %s19
      %p210 = scmp.lt.s32.totalorder %s209, 15
      %s211 = scalar_select %p210, %s209, 15
      %s212 = smul.addr %s211, 8
      %s213 = scalar_lea.vmem %s2, %s212
      %p214 = pneg %p97
      %p215 = pneg %p94
      %p216 = pneg %p118
      %p217 = pneg %p115
      %p218 = pneg %p144
      %p219 = pneg %p141
      %s220 = smul.u32 8, %s19
      %p221 = scmp.lt.s32.totalorder %s220, 15
      %s222 = scalar_select %p221, %s220, 15
      %s223 = smul.addr %s222, 4
      %s224 = scalar_lea.vmem %s4, %s223
      %s225 = smul.u32 8, %s19
      %p226 = scmp.lt.s32.totalorder %s225, 15
      %s227 = scalar_select %p226, %s225, 15
      %p228 = scmp.lt.s32.totalorder %s20, 0
      %s229 = scalar_select %p228, %s20, 0
      %s230 = sadd.s32 %s229, %s227
      %s231 = smul.addr %s230, 2
      %s232 = scalar_lea.vmem %s0, %s231
      %s233 = smul.u32 8, %s19
      %s234 = smul.u32 8, %s19
      %p235 = scmp.lt.s32.totalorder %s234, 15
      %s236 = scalar_select %p235, %s234, 15
      %s237 = smul.addr %s236, 8
      %s238 = scalar_lea.vmem %s2, %s237
      %s239 = smul.u32 8, %s19
      %s240 = smul.u32 8, %s19
      %p241 = scmp.lt.s32.totalorder %s240, 15
      %s242 = scalar_select %p241, %s240, 15
      %s243 = smul.addr %s242, 4
      %s244 = scalar_lea.vmem %s4, %s243
      %s245 = smul.u32 8, %s19
      %p247 = scmp.eq.s32.totalorder %s20, 0
      // Predicated region
      $region37: #{gcn_model_forward.8} parent=35 // pred_check
        %p248 = pneg %p247
      $region38: #{gcn_model_forward.8} parent=35 // pred_check_branch
        %250 = sbr.rel (%p248) target = $region40
      $region39: #{gcn_model_forward.8} parent=35 // pred_region
        %251 = vst [vmem:[#allocation2] sm:$0xff] 0.0
        %252 = vst [vmem:[#allocation2 + $0x8] sm:$0xff] 0.0
        %253 = vst [vmem:[#allocation2 + $0x10] sm:$0xff] 0.0
        %254 = vst [vmem:[#allocation2 + $0x18] sm:$0xff] 0.0
        %255 = vst [vmem:[#allocation2 + $0x20] sm:$0xff] 0.0
        %256 = vst [vmem:[#allocation2 + $0x28] sm:$0xff] 0.0
        %257 = vst [vmem:[#allocation2 + $0x30] sm:$0xff] 0.0
        %258 = vst [vmem:[#allocation2 + $0x38] sm:$0xff] 0.0
      $region40: #{gcn_model_forward.8} parent=35 // pred_fallthru
        _
      %s259 = smul.u32 %s20, 128
      %s260 = sshra.s32 %s259, 3
      %s261 = sand.u32 %s259, 7
      %s262 = smul.addr %s260, 4
      %s263 = scalar_lea.vmem %s1, %s262
      %v264 = vld [vmem:[%s263] sm:$0xf]
      %v265 = vld [vmem:[%s263 + $0x4] sm:$0xf]
      %v266 = vld [vmem:[%s263 + $0x8] sm:$0xf]
      %v267 = vld [vmem:[%s263 + $0xc] sm:$0xf]
      %v268 = vld [vmem:[%s263 + $0x10] sm:$0xf]
      %v269 = vld [vmem:[%s263 + $0x14] sm:$0xf]
      %v270 = vld [vmem:[%s263 + $0x18] sm:$0xf]
      %v271 = vld [vmem:[%s263 + $0x1c] sm:$0xf]
      %v272 = vld [vmem:[%s263 + $0x20] sm:$0xf]
      %v273 = vld [vmem:[%s263 + $0x24] sm:$0xf]
      %v274 = vld [vmem:[%s263 + $0x28] sm:$0xf]
      %v275 = vld [vmem:[%s263 + $0x2c] sm:$0xf]
      %v276 = vld [vmem:[%s263 + $0x30] sm:$0xf]
      %v277 = vld [vmem:[%s263 + $0x34] sm:$0xf]
      %v278 = vld [vmem:[%s263 + $0x38] sm:$0xf]
      %v279 = vld [vmem:[%s263 + $0x3c] sm:$0xf]
      %v280 = vld [vmem:[#allocation2] sm:$0xff]
      %v281 = vld [vmem:[#allocation2 + $0x8] sm:$0xff]
      %v282 = vld [vmem:[#allocation2 + $0x10] sm:$0xff]
      %v283 = vld [vmem:[#allocation2 + $0x18] sm:$0xff]
      %v284 = vld [vmem:[#allocation2 + $0x20] sm:$0xff]
      %v285 = vld [vmem:[#allocation2 + $0x28] sm:$0xff]
      %v286 = vld [vmem:[#allocation2 + $0x30] sm:$0xff]
      %v287 = vld [vmem:[#allocation2 + $0x38] sm:$0xff]
      %v288 = vld [vmem:[%s232] sm:$0x3]
      %v289 = vld [vmem:[%s232 + $0x2] sm:$0x3]
      %v290 = vld [vmem:[%s232 + $0x4] sm:$0x3]
      %v291 = vld [vmem:[%s232 + $0x6] sm:$0x3]
      %v292 = vld [vmem:[%s232 + $0x8] sm:$0x3]
      %v293 = vld [vmem:[%s232 + $0xa] sm:$0x3]
      %v294 = vld [vmem:[%s232 + $0xc] sm:$0x3]
      %v295 = vld [vmem:[%s232 + $0xe] sm:$0x3]
      %v296 = vunpack.c.l.s8.bf16 %v288
      %v297 = vunpack.c.l.s8.bf16 %v289
      %v298 = vunpack.c.l.s8.bf16 %v290
      %v299 = vunpack.c.l.s8.bf16 %v291
      %v300 = vunpack.c.l.s8.bf16 %v292
      %v301 = vunpack.c.l.s8.bf16 %v293
      %v302 = vunpack.c.l.s8.bf16 %v294
      %v303 = vunpack.c.l.s8.bf16 %v295
      %v312 = vunpack.c.l.b16 %v296
      %v313 = vunpack.c.l.b16 %v297
      %v314 = vunpack.c.l.b16 %v298
      %v315 = vunpack.c.l.b16 %v299
      %v316 = vunpack.c.l.b16 %v300
      %v317 = vunpack.c.l.b16 %v301
      %v318 = vunpack.c.l.b16 %v302
      %v319 = vunpack.c.l.b16 %v303
      %v320 = vpack.c.b16 %v313, %v312
      %v321 = vpack.c.b16 %v315, %v314
      %v322 = vpack.c.b16 %v317, %v316
      %v323 = vpack.c.b16 %v319, %v318
      %v344 = vunpack.c.l.b16 %v264
      %v345 = vunpack.c.l.b16 %v265
      %v346 = vunpack.c.l.b16 %v266
      %v347 = vunpack.c.l.b16 %v267
      %v348 = vunpack.c.l.b16 %v268
      %v349 = vunpack.c.l.b16 %v269
      %v350 = vunpack.c.l.b16 %v270
      %v351 = vunpack.c.l.b16 %v271
      %v352 = vunpack.c.l.b16 %v272
      %v353 = vunpack.c.l.b16 %v273
      %v354 = vunpack.c.l.b16 %v274
      %v355 = vunpack.c.l.b16 %v275
      %v356 = vunpack.c.l.b16 %v276
      %v357 = vunpack.c.l.b16 %v277
      %v358 = vunpack.c.l.b16 %v278
      %v359 = vunpack.c.l.b16 %v279
      %v360 = vpack.c.b16 %v345, %v344
      %v361 = vpack.c.b16 %v347, %v346
      %v362 = vpack.c.b16 %v349, %v348
      %v363 = vpack.c.b16 %v351, %v350
      %v364 = vpack.c.b16 %v353, %v352
      %v365 = vpack.c.b16 %v355, %v354
      %v366 = vpack.c.b16 %v357, %v356
      %v367 = vpack.c.b16 %v359, %v358
      %376 = vmatprep.subr.bf16.mxu0 0
      %377 = vmatpush1.bf16.msra.mxu0 %v367
      %378 = vmatprep.subr.bf16.mxu0 0
      %379 = vmatpush1.bf16.msra.mxu0 %v366
      %380 = vmatprep.subr.bf16.mxu0 0
      %381 = vmatpush1.bf16.msra.mxu0 %v365
      %382 = vmatprep.subr.bf16.mxu0 0
      %383 = vmatpush1.bf16.msra.mxu0 %v364
      %384 = vmatprep.subr.bf16.mxu0 0
      %385 = vmatpush1.bf16.msra.mxu0 %v363
      %386 = vmatprep.subr.bf16.mxu0 0
      %387 = vmatpush1.bf16.msra.mxu0 %v362
      %388 = vmatprep.subr.bf16.mxu0 0
      %389 = vmatpush1.bf16.msra.mxu0 %v361
      %390 = vmatprep.subr.bf16.mxu0 0
      %391 = vmatpush1.bf16.msra.mxu0 %v360
      %392 = vmatprep.subr.bf16.mxu0 0
      %393 = vmatpush2.bf16.msra.mxu0 0
      %394 = vmatprep.subr.bf16.mxu0 0
      %395 = vmatpush2.bf16.msra.mxu0 0
      %396 = vmatprep.subr.bf16.mxu0 0
      %397 = vmatpush2.bf16.msra.mxu0 0
      %398 = vmatprep.subr.bf16.mxu0 0
      %399 = vmatpush2.bf16.msra.mxu0 0
      %400 = vmatprep.subr.bf16.mxu0 0
      %401 = vmatpush2.bf16.msra.mxu0 0
      %402 = vmatprep.subr.bf16.mxu0 0
      %403 = vmatpush2.bf16.msra.mxu0 0
      %404 = vmatprep.subr.bf16.mxu0 0
      %405 = vmatpush2.bf16.msra.mxu0 0
      %406 = vmatprep.subr.bf16.mxu0 0
      %407 = vmatpush2.bf16.msra.mxu0 0
      %408 = vmatprep.mubr.bf16.mxu0 0
      %409 = vmatmul.mubr.bf16.gmra.mxu0 %v320
      %v410 = vpop.f32.mrf.mxu0
      %v411 = vadd.f32 0.0, %v410
      %v412 = vpop.f32.mrf.mxu0
      %v413 = vpop.f32.mrf.mxu0
      %v414 = vadd.f32 0.0, %v413
      %v415 = vpop.f32.mrf.mxu0
      %416 = vmatprep.mubr.bf16.mxu0 0
      %417 = vmatmul.mubr.bf16.gmra.mxu0 %v321
      %v418 = vpop.f32.mrf.mxu0
      %v419 = vadd.f32 0.0, %v418
      %v420 = vpop.f32.mrf.mxu0
      %v421 = vpop.f32.mrf.mxu0
      %v422 = vadd.f32 0.0, %v421
      %v423 = vpop.f32.mrf.mxu0
      %424 = vmatprep.mubr.bf16.mxu0 0
      %425 = vmatmul.mubr.bf16.gmra.mxu0 %v322
      %v426 = vpop.f32.mrf.mxu0
      %v427 = vadd.f32 0.0, %v426
      %v428 = vpop.f32.mrf.mxu0
      %v429 = vpop.f32.mrf.mxu0
      %v430 = vadd.f32 0.0, %v429
      %v431 = vpop.f32.mrf.mxu0
      %432 = vmatprep.mubr.bf16.mxu0 0
      %433 = vmatmul.mubr.bf16.gmra.mxu0 %v323
      %v434 = vpop.f32.mrf.mxu0
      %v435 = vadd.f32 0.0, %v434
      %v436 = vpop.f32.mrf.mxu0
      %v437 = vpop.f32.mrf.mxu0
      %v438 = vadd.f32 0.0, %v437
      %v439 = vpop.f32.mrf.mxu0
      %440 = vdwg.mxu0
      %v441 = vadd.f32 %v280, %v411
      %v442 = vadd.f32 %v281, %v414
      %v443 = vadd.f32 %v282, %v419
      %v444 = vadd.f32 %v283, %v422
      %v445 = vadd.f32 %v284, %v427
      %v446 = vadd.f32 %v285, %v430
      %v447 = vadd.f32 %v286, %v435
      %v448 = vadd.f32 %v287, %v438
      %449 = vst [vmem:[#allocation2] sm:$0xff] %v441
      %450 = vst [vmem:[#allocation2 + $0x8] sm:$0xff] %v442
      %451 = vst [vmem:[#allocation2 + $0x10] sm:$0xff] %v443
      %452 = vst [vmem:[#allocation2 + $0x18] sm:$0xff] %v444
      %453 = vst [vmem:[#allocation2 + $0x20] sm:$0xff] %v445
      %454 = vst [vmem:[#allocation2 + $0x28] sm:$0xff] %v446
      %455 = vst [vmem:[#allocation2 + $0x30] sm:$0xff] %v447
      %456 = vst [vmem:[#allocation2 + $0x38] sm:$0xff] %v448
      // Predicated region
      $region41: #{gcn_model_forward.8} parent=35 // pred_check
        %p457 = pneg %p247
      $region42: #{gcn_model_forward.8} parent=35 // pred_check_branch
        %459 = sbr.rel (%p457) target = $region44
      $region43: #{gcn_model_forward.8} parent=35 // pred_region
        %v460 = vld [vmem:[%s238] sm:$0xff]
        %v461 = vld [vmem:[%s238 + $0x8] sm:$0xff]
        %v462 = vld [vmem:[%s238 + $0x10] sm:$0xff]
        %v463 = vld [vmem:[%s238 + $0x18] sm:$0xff]
        %v464 = vld [vmem:[%s238 + $0x20] sm:$0xff]
        %v465 = vld [vmem:[%s238 + $0x28] sm:$0xff]
        %v466 = vld [vmem:[%s238 + $0x30] sm:$0xff]
        %v467 = vld [vmem:[%s238 + $0x38] sm:$0xff]
        %v468 = vld [vmem:[#allocation2] sm:$0xff]
        %v469 = vld [vmem:[#allocation2 + $0x8] sm:$0xff]
        %v470 = vld [vmem:[#allocation2 + $0x10] sm:$0xff]
        %v471 = vld [vmem:[#allocation2 + $0x18] sm:$0xff]
        %v472 = vld [vmem:[#allocation2 + $0x20] sm:$0xff]
        %v473 = vld [vmem:[#allocation2 + $0x28] sm:$0xff]
        %v474 = vld [vmem:[#allocation2 + $0x30] sm:$0xff]
        %v475 = vld [vmem:[#allocation2 + $0x38] sm:$0xff]
        %477 = vset.pattern.permute.xlu0 0
        %478 = vperm.xlu0 %477, %v460
        %v479 = vpop.permute.xlu0 %478
        %482 = vset.pattern.permute.xlu0 0
        %483 = vperm.xlu0 %482, %v461
        %v484 = vpop.permute.xlu0 %483
        %487 = vset.pattern.permute.xlu0 0
        %488 = vperm.xlu0 %487, %v462
        %v489 = vpop.permute.xlu0 %488
        %492 = vset.pattern.permute.xlu0 0
        %493 = vperm.xlu0 %492, %v463
        %v494 = vpop.permute.xlu0 %493
        %497 = vset.pattern.permute.xlu0 0
        %498 = vperm.xlu0 %497, %v464
        %v499 = vpop.permute.xlu0 %498
        %502 = vset.pattern.permute.xlu0 0
        %503 = vperm.xlu0 %502, %v465
        %v504 = vpop.permute.xlu0 %503
        %507 = vset.pattern.permute.xlu0 0
        %508 = vperm.xlu0 %507, %v466
        %v509 = vpop.permute.xlu0 %508
        %512 = vset.pattern.permute.xlu0 0
        %513 = vperm.xlu0 %512, %v467
        %v514 = vpop.permute.xlu0 %513
        %v516 = vmul.f32 %v468, %v479
        %v517 = vmul.f32 %v469, %v484
        %v518 = vmul.f32 %v470, %v489
        %v519 = vmul.f32 %v471, %v494
        %v520 = vmul.f32 %v472, %v499
        %v521 = vmul.f32 %v473, %v504
        %v522 = vmul.f32 %v474, %v509
        %v523 = vmul.f32 %v475, %v514
        %v524 = vld [vmem:[%s3] sm:$0x1]
        %v526 = vlaneseq
        %v527 = vshrl.u32 %v526, 7
        %v528 = vsub.s32 0, %v527
        %v529 = vrot.slane %v524, %v528
        %v531 = vadd.f32 %v516, %v529
        %v532 = vadd.f32 %v517, %v529
        %v533 = vadd.f32 %v518, %v529
        %v534 = vadd.f32 %v519, %v529
        %v535 = vadd.f32 %v520, %v529
        %v536 = vadd.f32 %v521, %v529
        %v537 = vadd.f32 %v522, %v529
        %v538 = vadd.f32 %v523, %v529
        %v539 = vmax.f32 %v531, 0.0
        %v540 = vmax.f32 %v532, 0.0
        %v541 = vmax.f32 %v533, 0.0
        %v542 = vmax.f32 %v534, 0.0
        %v543 = vmax.f32 %v535, 0.0
        %v544 = vmax.f32 %v536, 0.0
        %v545 = vmax.f32 %v537, 0.0
        %v546 = vmax.f32 %v538, 0.0
        %v547 = vpack.c.bf16 %v540, %v539
        %v548 = vpack.c.bf16 %v542, %v541
        %v549 = vpack.c.bf16 %v544, %v543
        %v550 = vpack.c.bf16 %v546, %v545
        %v555 = vunpack.c.l.b16 %v547
        %v556 = vunpack.c.h.b16 %v547
        %v557 = vunpack.c.l.b16 %v548
        %v558 = vunpack.c.h.b16 %v548
        %v559 = vunpack.c.l.b16 %v549
        %v560 = vunpack.c.h.b16 %v549
        %v561 = vunpack.c.l.b16 %v550
        %v562 = vunpack.c.h.b16 %v550
        %v563 = vpack.c.b16 %v555, %v555
        %v564 = vpack.c.b16 %v556, %v556
        %v565 = vpack.c.b16 %v557, %v557
        %v566 = vpack.c.b16 %v558, %v558
        %v567 = vpack.c.b16 %v559, %v559
        %v568 = vpack.c.b16 %v560, %v560
        %v569 = vpack.c.b16 %v561, %v561
        %v570 = vpack.c.b16 %v562, %v562
        %579 = vst [vmem:[%s244] sm:$0xf] %v563
        %580 = vst [vmem:[%s244 + $0x4] sm:$0xf] %v564
        %581 = vst [vmem:[%s244 + $0x8] sm:$0xf] %v565
        %582 = vst [vmem:[%s244 + $0xc] sm:$0xf] %v566
        %583 = vst [vmem:[%s244 + $0x10] sm:$0xf] %v567
        %584 = vst [vmem:[%s244 + $0x14] sm:$0xf] %v568
        %585 = vst [vmem:[%s244 + $0x18] sm:$0xf] %v569
        %586 = vst [vmem:[%s244 + $0x1c] sm:$0xf] %v570
      $region44: #{gcn_model_forward.8} parent=35 // pred_fallthru
        _
      %s587 = smul.u32 8, %s19
      %p588 = scmp.lt.s32.totalorder %s587, 15
      %s589 = scalar_select %p588, %s587, 15
      %s590 = smul.addr %s589, 4
      %s591 = scalar_lea.vmem %s4, %s590
      // Predicated region
      $region45: #{gcn_model_forward.8} parent=35 // pred_check
        %p592 = pneg %p141
      $region46: #{gcn_model_forward.8} parent=35 // pred_check_branch
        %594 = sbr.rel (%p592) target = $region48
      $region47: #{gcn_model_forward.8} parent=35 // pred_region
        %s595 = smul.u32 8, %s19
      $region48: #{gcn_model_forward.8} parent=35 // pred_fallthru
        _
    $region36: #{gcn_model_forward.8} parent=5 // pred_fallthru
      _
    %p596 = scmp.le.s32.totalorder 2, %s10
    // Predicated region
    $region49: #{gcn_model_forward.8} parent=5 // pred_check
      %p597 = pneg %p596
    $region50: #{gcn_model_forward.8} parent=5 // pred_check_branch
      %599 = sbr.rel (%p597) target = $region52
    $region51: #{gcn_model_forward.8} parent=5 // pred_region
      %s600 = ssub.s32 %s10, 2
      // Predicated region
      $region53: #{gcn_model_forward.8} parent=51 // pred_check
        %p601 = pneg %p147
      $region54: #{gcn_model_forward.8} parent=51 // pred_check_branch
        %603 = sbr.rel (%p601) target = $region56
      $region55: #{gcn_model_forward.8} parent=51 // pred_region
        %s604 = smul.u32 8, %s21
        %p605 = scmp.lt.s32.totalorder %s604, 15
        %s606 = scalar_select %p605, %s604, 15
        %s607 = smul.addr %s606, 4
        %s608 = scalar_lea.vmem %s4, %s607
      $region56: #{gcn_model_forward.8} parent=51 // pred_fallthru
        _
    $region52: #{gcn_model_forward.8} parent=5 // pred_fallthru
      _
  $region6: #{gcn_model_forward.8} parent=0 // loop_footer
    %s14 = sadd.s32 1, %s10
  $region7: #{gcn_model_forward.8} parent=0 // loop_footer_branch
    %9 = sbr.rel target = $region3
  $region8: #{gcn_model_forward.8} parent=0 // loop_exit
    _

// kernel: gcn_model_forward.6
$region0: #{gcn_model_forward.6}
  #allocation0 [shape = 'u32[]', space=smem, size = 0x4, offset = 0x4, fixed_abs, tag = 'smem constant byte address 0x4 - core index']
  #allocation1 [shape = 'u32[144,128]{1,0:T(1,128)}', space=vmem, size = 0x12000, scoped, tag = 'internal scratch']
  #allocation2 [shape = 'f32[64,128]{1,0:T(8,128)}', space=vmem, size = 0x8000, scoped, tag = 'scratch operand']
  %s0 = inlined_call_operand.vmem [shape: s8[128,128], index: 0, kind: input, shape index: {}]
  %s1 = inlined_call_operand.vmem [shape: bf16[128,128], index: 1, kind: input, shape index: {}]
  %s2 = inlined_call_operand.vmem [shape: f32[128,1], index: 2, kind: input, shape index: {}]
  %s3 = inlined_call_operand.vmem [shape: f32[1,128], index: 3, kind: input, shape index: {}]
  %s4 = inlined_call_operand.vmem [shape: bf16[128,128], index: 4, kind: input, shape index: {}]
  %s5 = inlined_call_operand.vmem [shape: bf16[128,128], index: 5, kind: output, shape index: {}]
  %s6 = sld [smem:[#allocation0]]
  $region61: #{gcn_model_forward.6} parent=0
    _
  %s8 = ssub.s32 1, %s6
  %s9 = scalar_select 0, %s8, %s6
  loop: start=0, step=1, limit=4
  $region2: #{gcn_model_forward.6} parent=0 // loop_pre_header
    _
  $region3: #{gcn_model_forward.6} parent=0 // loop_header
    %s11 = sphi 0, %s15
    %p12 = scmp.ge.s32.totalorder %s11, 4
    %s18 = sphi 0, %s30
    %s19 = sphi 0, %s26
    %s20 = sphi 0, %s18
    %s21 = sphi 0, %s19
    %s22 = sphi 0, %s20
    %s23 = sphi 0, %s21
    %s35 = sphi 0, %s37
    %s38 = sphi 0, %s35
    %s39 = sphi 0, %s38
    %s55 = sphi 0, %s39
    %s59 = sphi 0, %s59
    %s61 = sphi 0, %s59
    %s62 = sphi 0, %s61
    %s76 = sphi 0, %s62
    %s82 = sphi 0, %s84
    %s85 = sphi 0, %s82
    %s86 = sphi 0, %s85
    %s102 = sphi 0, %s86
    %s106 = sphi 0, %s106
    %s108 = sphi 0, %s106
    %s109 = sphi 0, %s108
    %s123 = sphi 0, %s109
    %s127 = sphi 0, %s127
    %s129 = sphi 0, %s127
    %s130 = sphi 0, %s129
    %s144 = sphi 0, %s130
    %s150 = sphi 0, %s152
    %s153 = sphi 0, %s150
    %s154 = sphi 0, %s153
    %s170 = sphi 0, %s154
  $region4: #{gcn_model_forward.6} parent=0 // loop_header_branch
    %14 = sbr.rel (%p12) target = $region8
  $region5: #{gcn_model_forward.6} parent=0 // loop_body
    %s16 = ssub.s32 %s11, 1
    %s17 = ssub.s32 %s11, 2
    %s24 = sadd.s32 1, %s19
    %p25 = scmp.ge.s32.totalorder %s24, 1
    %s26 = scalar_select %p25, 0, %s24
    %s27 = sadd.s32 1, %s18
    %s28 = scalar_select %p25, %s27, %s18
    %p29 = scmp.ge.s32.totalorder %s28, 2
    %s30 = scalar_select %p29, 0, %s28
    %s31 = ssub.s32 %s18, %s30
    %s32 = ssub.s32 %s19, %s26
    %s33 = sor.u32 %s31, %s32
    %p34 = scmp.eq.s32.totalorder %s33, 0
    %s36 = sadd.s32 %s35, 1
    %s37 = scalar_select %p34, %s35, %s36
    %p40 = pneg %p34
    %p41 = scmp.eq.s32.totalorder %s11, 1
    %p42 = por %p40, %p41
    %p43 = scmp.ne.s32.totalorder %s35, %s38
    %p44 = scmp.eq.s32.totalorder %s11, 0
    %p45 = por %p43, %p44
    %p46 = scmp.ne.s32.totalorder %s35, %s38
    %p47 = scmp.eq.s32.totalorder %s16, 1
    %p48 = por %p46, %p47
    %p49 = scmp.ne.s32.totalorder %s38, %s39
    %p50 = scmp.eq.s32.totalorder %s16, 0
    %p51 = por %p49, %p50
    %p52 = scmp.ne.s32.totalorder %s38, %s39
    %p53 = scmp.eq.s32.totalorder %s17, 1
    %p54 = por %p52, %p53
    %p56 = scmp.ne.s32.totalorder %s39, %s55
    %p57 = scmp.eq.s32.totalorder %s17, 0
    %p58 = por %p56, %p57
    %s60 = sadd.s32 %s59, 1
    %p63 = scmp.eq.s32.totalorder %s11, 1
    %p64 = scmp.ne.s32.totalorder %s59, %s61
    %p65 = scmp.eq.s32.totalorder %s11, 0
    %p66 = por %p64, %p65
    %p67 = scmp.ne.s32.totalorder %s59, %s61
    %p68 = scmp.eq.s32.totalorder %s16, 1
    %p69 = por %p67, %p68
    %p70 = scmp.ne.s32.totalorder %s61, %s62
    %p71 = scmp.eq.s32.totalorder %s16, 0
    %p72 = por %p70, %p71
    %p73 = scmp.ne.s32.totalorder %s61, %s62
    %p74 = scmp.eq.s32.totalorder %s17, 1
    %p75 = por %p73, %p74
    %p77 = scmp.ne.s32.totalorder %s62, %s76
    %p78 = scmp.eq.s32.totalorder %s17, 0
    %p79 = por %p77, %p78
    %s80 = ssub.s32 %s18, %s30
    %p81 = scmp.eq.s32.totalorder %s80, 0
    %s83 = sadd.s32 %s82, 1
    %s84 = scalar_select %p81, %s82, %s83
    %p87 = pneg %p81
    %p88 = scmp.eq.s32.totalorder %s11, 1
    %p89 = por %p87, %p88
    %p90 = scmp.ne.s32.totalorder %s82, %s85
    %p91 = scmp.eq.s32.totalorder %s11, 0
    %p92 = por %p90, %p91
    %p93 = scmp.ne.s32.totalorder %s82, %s85
    %p94 = scmp.eq.s32.totalorder %s16, 1
    %p95 = por %p93, %p94
    %p96 = scmp.ne.s32.totalorder %s85, %s86
    %p97 = scmp.eq.s32.totalorder %s16, 0
    %p98 = por %p96, %p97
    %p99 = scmp.ne.s32.totalorder %s85, %s86
    %p100 = scmp.eq.s32.totalorder %s17, 1
    %p101 = por %p99, %p100
    %p103 = scmp.ne.s32.totalorder %s86, %s102
    %p104 = scmp.eq.s32.totalorder %s17, 0
    %p105 = por %p103, %p104
    %s107 = sadd.s32 %s106, 1
    %p110 = scmp.eq.s32.totalorder %s11, 1
    %p111 = scmp.ne.s32.totalorder %s106, %s108
    %p112 = scmp.eq.s32.totalorder %s11, 0
    %p113 = por %p111, %p112
    %p114 = scmp.ne.s32.totalorder %s106, %s108
    %p115 = scmp.eq.s32.totalorder %s16, 1
    %p116 = por %p114, %p115
    %p117 = scmp.ne.s32.totalorder %s108, %s109
    %p118 = scmp.eq.s32.totalorder %s16, 0
    %p119 = por %p117, %p118
    %p120 = scmp.ne.s32.totalorder %s108, %s109
    %p121 = scmp.eq.s32.totalorder %s17, 1
    %p122 = por %p120, %p121
    %p124 = scmp.ne.s32.totalorder %s109, %s123
    %p125 = scmp.eq.s32.totalorder %s17, 0
    %p126 = por %p124, %p125
    %s128 = sadd.s32 %s127, 1
    %p131 = scmp.eq.s32.totalorder %s11, 1
    %p132 = scmp.ne.s32.totalorder %s127, %s129
    %p133 = scmp.eq.s32.totalorder %s11, 0
    %p134 = por %p132, %p133
    %p135 = scmp.ne.s32.totalorder %s127, %s129
    %p136 = scmp.eq.s32.totalorder %s16, 1
    %p137 = por %p135, %p136
    %p138 = scmp.ne.s32.totalorder %s129, %s130
    %p139 = scmp.eq.s32.totalorder %s16, 0
    %p140 = por %p138, %p139
    %p141 = scmp.ne.s32.totalorder %s129, %s130
    %p142 = scmp.eq.s32.totalorder %s17, 1
    %p143 = por %p141, %p142
    %p145 = scmp.ne.s32.totalorder %s130, %s144
    %p146 = scmp.eq.s32.totalorder %s17, 0
    %p147 = por %p145, %p146
    %s148 = ssub.s32 %s18, %s30
    %p149 = scmp.eq.s32.totalorder %s148, 0
    %s151 = sadd.s32 %s150, 1
    %s152 = scalar_select %p149, %s150, %s151
    %p155 = pneg %p149
    %p156 = scmp.eq.s32.totalorder %s11, 1
    %p157 = por %p155, %p156
    %p158 = scmp.ne.s32.totalorder %s150, %s153
    %p159 = scmp.eq.s32.totalorder %s11, 0
    %p160 = por %p158, %p159
    %p161 = scmp.ne.s32.totalorder %s150, %s153
    %p162 = scmp.eq.s32.totalorder %s16, 1
    %p163 = por %p161, %p162
    %p164 = scmp.ne.s32.totalorder %s153, %s154
    %p165 = scmp.eq.s32.totalorder %s16, 0
    %p166 = por %p164, %p165
    %p167 = scmp.ne.s32.totalorder %s153, %s154
    %p168 = scmp.eq.s32.totalorder %s17, 1
    %p169 = por %p167, %p168
    %p171 = scmp.ne.s32.totalorder %s154, %s170
    %p172 = scmp.eq.s32.totalorder %s17, 0
    %p173 = por %p171, %p172
    %p174 = scmp.le.s32.totalorder 1, %s11
    %p175 = scmp.lt.s32.totalorder %s11, 3
    %p176 = pnand %p174, %p175
    %p177 = pneg %p176
    // Predicated region
    $region9: #{gcn_model_forward.6} parent=5 // pred_check
      _
    $region10: #{gcn_model_forward.6} parent=5 // pred_check_branch
      %179 = sbr.rel (%p176) target = $region12
    $region11: #{gcn_model_forward.6} parent=5 // pred_region
      %s180 = ssub.s32 %s11, 1
      // Predicated region
      $region13: #{gcn_model_forward.6} parent=11 // pred_check
        %p181 = pneg %p72
      $region14: #{gcn_model_forward.6} parent=11 // pred_check_branch
        %183 = sbr.rel (%p181) target = $region16
      $region15: #{gcn_model_forward.6} parent=11 // pred_region
        _
      $region16: #{gcn_model_forward.6} parent=11 // pred_fallthru
        _
      // Predicated region
      $region17: #{gcn_model_forward.6} parent=11 // pred_check
        %p184 = pneg %p119
      $region18: #{gcn_model_forward.6} parent=11 // pred_check_branch
        %186 = sbr.rel (%p184) target = $region20
      $region19: #{gcn_model_forward.6} parent=11 // pred_region
        _
      $region20: #{gcn_model_forward.6} parent=11 // pred_fallthru
        _
      // Predicated region
      $region21: #{gcn_model_forward.6} parent=11 // pred_check
        %p187 = pneg %p140
      $region22: #{gcn_model_forward.6} parent=11 // pred_check_branch
        %189 = sbr.rel (%p187) target = $region24
      $region23: #{gcn_model_forward.6} parent=11 // pred_region
        _
      $region24: #{gcn_model_forward.6} parent=11 // pred_fallthru
        _
    $region12: #{gcn_model_forward.6} parent=5 // pred_fallthru
      _
    %p190 = scmp.lt.s32.totalorder %s11, 2
    // Predicated region
    $region25: #{gcn_model_forward.6} parent=5 // pred_check
      %p191 = pneg %p190
    $region26: #{gcn_model_forward.6} parent=5 // pred_check_branch
      %193 = sbr.rel (%p191) target = $region28
    $region27: #{gcn_model_forward.6} parent=5 // pred_region
      // Predicated region
      $region29: #{gcn_model_forward.6} parent=27 // pred_check
        %p194 = pneg %p45
      $region30: #{gcn_model_forward.6} parent=27 // pred_check_branch
        %196 = sbr.rel (%p194) target = $region32
      $region31: #{gcn_model_forward.6} parent=27 // pred_region
        %s197 = smul.u32 8, %s18
        %p198 = scmp.lt.s32.totalorder %s197, 15
        %s199 = scalar_select %p198, %s197, 15
        %p200 = scmp.lt.s32.totalorder %s19, 0
        %s201 = scalar_select %p200, %s19, 0
        %s202 = sadd.s32 %s201, %s199
        %s203 = smul.addr %s202, 2
        %s204 = scalar_lea.vmem %s0, %s203
        %s205 = smul.u32 8, %s18
      $region32: #{gcn_model_forward.6} parent=27 // pred_fallthru
        _
      // Predicated region
      $region33: #{gcn_model_forward.6} parent=27 // pred_check
        %p206 = pneg %p92
      $region34: #{gcn_model_forward.6} parent=27 // pred_check_branch
        %208 = sbr.rel (%p206) target = $region36
      $region35: #{gcn_model_forward.6} parent=27 // pred_region
        %s209 = smul.u32 8, %s18
        %p210 = scmp.lt.s32.totalorder %s209, 15
        %s211 = scalar_select %p210, %s209, 15
        %s212 = smul.addr %s211, 8
        %s213 = scalar_lea.vmem %s2, %s212
        %s214 = smul.u32 8, %s18
      $region36: #{gcn_model_forward.6} parent=27 // pred_fallthru
        _
    $region28: #{gcn_model_forward.6} parent=5 // pred_fallthru
      _
    %p215 = scmp.le.s32.totalorder 1, %s11
    %p216 = scmp.lt.s32.totalorder %s11, 3
    %p217 = pnand %p215, %p216
    %p218 = pneg %p217
    // Predicated region
    $region37: #{gcn_model_forward.6} parent=5 // pred_check
      _
    $region38: #{gcn_model_forward.6} parent=5 // pred_check_branch
      %220 = sbr.rel (%p217) target = $region40
    $region39: #{gcn_model_forward.6} parent=5 // pred_region
      %s221 = ssub.s32 %s11, 1
      %s222 = smul.u32 8, %s20
      %p223 = scmp.lt.s32.totalorder %s222, 15
      %s224 = scalar_select %p223, %s222, 15
      %p225 = scmp.lt.s32.totalorder %s21, 0
      %s226 = scalar_select %p225, %s21, 0
      %s227 = sadd.s32 %s226, %s224
      %s228 = smul.addr %s227, 2
      %s229 = scalar_lea.vmem %s0, %s228
      %p230 = pneg %p51
      %p231 = pneg %p48
      %p232 = pneg %p72
      %p233 = pneg %p69
      %s234 = smul.u32 8, %s20
      %p235 = scmp.lt.s32.totalorder %s234, 15
      %s236 = scalar_select %p235, %s234, 15
      %s237 = smul.addr %s236, 8
      %s238 = scalar_lea.vmem %s2, %s237
      %p239 = pneg %p98
      %p240 = pneg %p95
      %p241 = pneg %p119
      %p242 = pneg %p116
      %p243 = pneg %p140
      %p244 = pneg %p137
      %p245 = pneg %p166
      %p246 = pneg %p163
      %s247 = smul.u32 8, %s20
      %p248 = scmp.lt.s32.totalorder %s247, 15
      %s249 = scalar_select %p248, %s247, 15
      %s250 = smul.addr %s249, 4
      %s251 = scalar_lea.vmem %s5, %s250
      %s252 = smul.u32 8, %s20
      %p253 = scmp.lt.s32.totalorder %s252, 15
      %s254 = scalar_select %p253, %s252, 15
      %p255 = scmp.lt.s32.totalorder %s21, 0
      %s256 = scalar_select %p255, %s21, 0
      %s257 = sadd.s32 %s256, %s254
      %s258 = smul.addr %s257, 2
      %s259 = scalar_lea.vmem %s0, %s258
      %s260 = smul.u32 8, %s20
      %s261 = smul.u32 8, %s20
      %p262 = scmp.lt.s32.totalorder %s261, 15
      %s263 = scalar_select %p262, %s261, 15
      %s264 = smul.addr %s263, 8
      %s265 = scalar_lea.vmem %s2, %s264
      %s266 = smul.u32 8, %s20
      %s267 = smul.u32 8, %s20
      %p268 = scmp.lt.s32.totalorder %s267, 15
      %s269 = scalar_select %p268, %s267, 15
      %s270 = smul.addr %s269, 4
      %s271 = scalar_lea.vmem %s5, %s270
      %s272 = smul.u32 8, %s20
      %p274 = scmp.eq.s32.totalorder %s21, 0
      // Predicated region
      $region41: #{gcn_model_forward.6} parent=39 // pred_check
        %p275 = pneg %p274
      $region42: #{gcn_model_forward.6} parent=39 // pred_check_branch
        %277 = sbr.rel (%p275) target = $region44
      $region43: #{gcn_model_forward.6} parent=39 // pred_region
        %278 = vst [vmem:[#allocation2] sm:$0xff] 0.0
        %279 = vst [vmem:[#allocation2 + $0x8] sm:$0xff] 0.0
        %280 = vst [vmem:[#allocation2 + $0x10] sm:$0xff] 0.0
        %281 = vst [vmem:[#allocation2 + $0x18] sm:$0xff] 0.0
        %282 = vst [vmem:[#allocation2 + $0x20] sm:$0xff] 0.0
        %283 = vst [vmem:[#allocation2 + $0x28] sm:$0xff] 0.0
        %284 = vst [vmem:[#allocation2 + $0x30] sm:$0xff] 0.0
        %285 = vst [vmem:[#allocation2 + $0x38] sm:$0xff] 0.0
      $region44: #{gcn_model_forward.6} parent=39 // pred_fallthru
        _
      %s286 = smul.u32 %s21, 128
      %s287 = sshra.s32 %s286, 3
      %s288 = sand.u32 %s286, 7
      %s289 = smul.addr %s287, 4
      %s290 = scalar_lea.vmem %s1, %s289
      %v291 = vld [vmem:[%s290] sm:$0xf]
      %v292 = vld [vmem:[%s290 + $0x4] sm:$0xf]
      %v293 = vld [vmem:[%s290 + $0x8] sm:$0xf]
      %v294 = vld [vmem:[%s290 + $0xc] sm:$0xf]
      %v295 = vld [vmem:[%s290 + $0x10] sm:$0xf]
      %v296 = vld [vmem:[%s290 + $0x14] sm:$0xf]
      %v297 = vld [vmem:[%s290 + $0x18] sm:$0xf]
      %v298 = vld [vmem:[%s290 + $0x1c] sm:$0xf]
      %v299 = vld [vmem:[%s290 + $0x20] sm:$0xf]
      %v300 = vld [vmem:[%s290 + $0x24] sm:$0xf]
      %v301 = vld [vmem:[%s290 + $0x28] sm:$0xf]
      %v302 = vld [vmem:[%s290 + $0x2c] sm:$0xf]
      %v303 = vld [vmem:[%s290 + $0x30] sm:$0xf]
      %v304 = vld [vmem:[%s290 + $0x34] sm:$0xf]
      %v305 = vld [vmem:[%s290 + $0x38] sm:$0xf]
      %v306 = vld [vmem:[%s290 + $0x3c] sm:$0xf]
      %v307 = vld [vmem:[#allocation2] sm:$0xff]
      %v308 = vld [vmem:[#allocation2 + $0x8] sm:$0xff]
      %v309 = vld [vmem:[#allocation2 + $0x10] sm:$0xff]
      %v310 = vld [vmem:[#allocation2 + $0x18] sm:$0xff]
      %v311 = vld [vmem:[#allocation2 + $0x20] sm:$0xff]
      %v312 = vld [vmem:[#allocation2 + $0x28] sm:$0xff]
      %v313 = vld [vmem:[#allocation2 + $0x30] sm:$0xff]
      %v314 = vld [vmem:[#allocation2 + $0x38] sm:$0xff]
      %v315 = vld [vmem:[%s259] sm:$0x3]
      %v316 = vld [vmem:[%s259 + $0x2] sm:$0x3]
      %v317 = vld [vmem:[%s259 + $0x4] sm:$0x3]
      %v318 = vld [vmem:[%s259 + $0x6] sm:$0x3]
      %v319 = vld [vmem:[%s259 + $0x8] sm:$0x3]
      %v320 = vld [vmem:[%s259 + $0xa] sm:$0x3]
      %v321 = vld [vmem:[%s259 + $0xc] sm:$0x3]
      %v322 = vld [vmem:[%s259 + $0xe] sm:$0x3]
      %v323 = vunpack.c.l.s8.bf16 %v315
      %v324 = vunpack.c.l.s8.bf16 %v316
      %v325 = vunpack.c.l.s8.bf16 %v317
      %v326 = vunpack.c.l.s8.bf16 %v318
      %v327 = vunpack.c.l.s8.bf16 %v319
      %v328 = vunpack.c.l.s8.bf16 %v320
      %v329 = vunpack.c.l.s8.bf16 %v321
      %v330 = vunpack.c.l.s8.bf16 %v322
      %v339 = vunpack.c.l.b16 %v323
      %v340 = vunpack.c.l.b16 %v324
      %v341 = vunpack.c.l.b16 %v325
      %v342 = vunpack.c.l.b16 %v326
      %v343 = vunpack.c.l.b16 %v327
      %v344 = vunpack.c.l.b16 %v328
      %v345 = vunpack.c.l.b16 %v329
      %v346 = vunpack.c.l.b16 %v330
      %v347 = vpack.c.b16 %v340, %v339
      %v348 = vpack.c.b16 %v342, %v341
      %v349 = vpack.c.b16 %v344, %v343
      %v350 = vpack.c.b16 %v346, %v345
      %v371 = vunpack.c.l.b16 %v291
      %v372 = vunpack.c.l.b16 %v292
      %v373 = vunpack.c.l.b16 %v293
      %v374 = vunpack.c.l.b16 %v294
      %v375 = vunpack.c.l.b16 %v295
      %v376 = vunpack.c.l.b16 %v296
      %v377 = vunpack.c.l.b16 %v297
      %v378 = vunpack.c.l.b16 %v298
      %v379 = vunpack.c.l.b16 %v299
      %v380 = vunpack.c.l.b16 %v300
      %v381 = vunpack.c.l.b16 %v301
      %v382 = vunpack.c.l.b16 %v302
      %v383 = vunpack.c.l.b16 %v303
      %v384 = vunpack.c.l.b16 %v304
      %v385 = vunpack.c.l.b16 %v305
      %v386 = vunpack.c.l.b16 %v306
      %v387 = vpack.c.b16 %v372, %v371
      %v388 = vpack.c.b16 %v374, %v373
      %v389 = vpack.c.b16 %v376, %v375
      %v390 = vpack.c.b16 %v378, %v377
      %v391 = vpack.c.b16 %v380, %v379
      %v392 = vpack.c.b16 %v382, %v381
      %v393 = vpack.c.b16 %v384, %v383
      %v394 = vpack.c.b16 %v386, %v385
      %403 = vmatprep.subr.bf16.mxu0 0
      %404 = vmatpush1.bf16.msra.mxu0 %v394
      %405 = vmatprep.subr.bf16.mxu0 0
      %406 = vmatpush1.bf16.msra.mxu0 %v393
      %407 = vmatprep.subr.bf16.mxu0 0
      %408 = vmatpush1.bf16.msra.mxu0 %v392
      %409 = vmatprep.subr.bf16.mxu0 0
      %410 = vmatpush1.bf16.msra.mxu0 %v391
      %411 = vmatprep.subr.bf16.mxu0 0
      %412 = vmatpush1.bf16.msra.mxu0 %v390
      %413 = vmatprep.subr.bf16.mxu0 0
      %414 = vmatpush1.bf16.msra.mxu0 %v389
      %415 = vmatprep.subr.bf16.mxu0 0
      %416 = vmatpush1.bf16.msra.mxu0 %v388
      %417 = vmatprep.subr.bf16.mxu0 0
      %418 = vmatpush1.bf16.msra.mxu0 %v387
      %419 = vmatprep.subr.bf16.mxu0 0
      %420 = vmatpush2.bf16.msra.mxu0 0
      %421 = vmatprep.subr.bf16.mxu0 0
      %422 = vmatpush2.bf16.msra.mxu0 0
      %423 = vmatprep.subr.bf16.mxu0 0
      %424 = vmatpush2.bf16.msra.mxu0 0
      %425 = vmatprep.subr.bf16.mxu0 0
      %426 = vmatpush2.bf16.msra.mxu0 0
      %427 = vmatprep.subr.bf16.mxu0 0
      %428 = vmatpush2.bf16.msra.mxu0 0
      %429 = vmatprep.subr.bf16.mxu0 0
      %430 = vmatpush2.bf16.msra.mxu0 0
      %431 = vmatprep.subr.bf16.mxu0 0
      %432 = vmatpush2.bf16.msra.mxu0 0
      %433 = vmatprep.subr.bf16.mxu0 0
      %434 = vmatpush2.bf16.msra.mxu0 0
      %435 = vmatprep.mubr.bf16.mxu0 0
      %436 = vmatmul.mubr.bf16.gmra.mxu0 %v347
      %v437 = vpop.f32.mrf.mxu0
      %v438 = vadd.f32 0.0, %v437
      %v439 = vpop.f32.mrf.mxu0
      %v440 = vpop.f32.mrf.mxu0
      %v441 = vadd.f32 0.0, %v440
      %v442 = vpop.f32.mrf.mxu0
      %443 = vmatprep.mubr.bf16.mxu0 0
      %444 = vmatmul.mubr.bf16.gmra.mxu0 %v348
      %v445 = vpop.f32.mrf.mxu0
      %v446 = vadd.f32 0.0, %v445
      %v447 = vpop.f32.mrf.mxu0
      %v448 = vpop.f32.mrf.mxu0
      %v449 = vadd.f32 0.0, %v448
      %v450 = vpop.f32.mrf.mxu0
      %451 = vmatprep.mubr.bf16.mxu0 0
      %452 = vmatmul.mubr.bf16.gmra.mxu0 %v349
      %v453 = vpop.f32.mrf.mxu0
      %v454 = vadd.f32 0.0, %v453
      %v455 = vpop.f32.mrf.mxu0
      %v456 = vpop.f32.mrf.mxu0
      %v457 = vadd.f32 0.0, %v456
      %v458 = vpop.f32.mrf.mxu0
      %459 = vmatprep.mubr.bf16.mxu0 0
      %460 = vmatmul.mubr.bf16.gmra.mxu0 %v350
      %v461 = vpop.f32.mrf.mxu0
      %v462 = vadd.f32 0.0, %v461
      %v463 = vpop.f32.mrf.mxu0
      %v464 = vpop.f32.mrf.mxu0
      %v465 = vadd.f32 0.0, %v464
      %v466 = vpop.f32.mrf.mxu0
      %467 = vdwg.mxu0
      %v468 = vadd.f32 %v307, %v438
      %v469 = vadd.f32 %v308, %v441
      %v470 = vadd.f32 %v309, %v446
      %v471 = vadd.f32 %v310, %v449
      %v472 = vadd.f32 %v311, %v454
      %v473 = vadd.f32 %v312, %v457
      %v474 = vadd.f32 %v313, %v462
      %v475 = vadd.f32 %v314, %v465
      %476 = vst [vmem:[#allocation2] sm:$0xff] %v468
      %477 = vst [vmem:[#allocation2 + $0x8] sm:$0xff] %v469
      %478 = vst [vmem:[#allocation2 + $0x10] sm:$0xff] %v470
      %479 = vst [vmem:[#allocation2 + $0x18] sm:$0xff] %v471
      %480 = vst [vmem:[#allocation2 + $0x20] sm:$0xff] %v472
      %481 = vst [vmem:[#allocation2 + $0x28] sm:$0xff] %v473
      %482 = vst [vmem:[#allocation2 + $0x30] sm:$0xff] %v474
      %483 = vst [vmem:[#allocation2 + $0x38] sm:$0xff] %v475
      // Predicated region
      $region45: #{gcn_model_forward.6} parent=39 // pred_check
        %p484 = pneg %p274
      $region46: #{gcn_model_forward.6} parent=39 // pred_check_branch
        %486 = sbr.rel (%p484) target = $region48
      $region47: #{gcn_model_forward.6} parent=39 // pred_region
        %v487 = vld [vmem:[%s265] sm:$0xff]
        %v488 = vld [vmem:[%s265 + $0x8] sm:$0xff]
        %v489 = vld [vmem:[%s265 + $0x10] sm:$0xff]
        %v490 = vld [vmem:[%s265 + $0x18] sm:$0xff]
        %v491 = vld [vmem:[%s265 + $0x20] sm:$0xff]
        %v492 = vld [vmem:[%s265 + $0x28] sm:$0xff]
        %v493 = vld [vmem:[%s265 + $0x30] sm:$0xff]
        %v494 = vld [vmem:[%s265 + $0x38] sm:$0xff]
        %v495 = vld [vmem:[#allocation2] sm:$0xff]
        %v496 = vld [vmem:[#allocation2 + $0x8] sm:$0xff]
        %v497 = vld [vmem:[#allocation2 + $0x10] sm:$0xff]
        %v498 = vld [vmem:[#allocation2 + $0x18] sm:$0xff]
        %v499 = vld [vmem:[#allocation2 + $0x20] sm:$0xff]
        %v500 = vld [vmem:[#allocation2 + $0x28] sm:$0xff]
        %v501 = vld [vmem:[#allocation2 + $0x30] sm:$0xff]
        %v502 = vld [vmem:[#allocation2 + $0x38] sm:$0xff]
        %504 = vset.pattern.permute.xlu0 0
        %505 = vperm.xlu0 %504, %v487
        %v506 = vpop.permute.xlu0 %505
        %509 = vset.pattern.permute.xlu0 0
        %510 = vperm.xlu0 %509, %v488
        %v511 = vpop.permute.xlu0 %510
        %514 = vset.pattern.permute.xlu0 0
        %515 = vperm.xlu0 %514, %v489
        %v516 = vpop.permute.xlu0 %515
        %519 = vset.pattern.permute.xlu0 0
        %520 = vperm.xlu0 %519, %v490
        %v521 = vpop.permute.xlu0 %520
        %524 = vset.pattern.permute.xlu0 0
        %525 = vperm.xlu0 %524, %v491
        %v526 = vpop.permute.xlu0 %525
        %529 = vset.pattern.permute.xlu0 0
        %530 = vperm.xlu0 %529, %v492
        %v531 = vpop.permute.xlu0 %530
        %534 = vset.pattern.permute.xlu0 0
        %535 = vperm.xlu0 %534, %v493
        %v536 = vpop.permute.xlu0 %535
        %539 = vset.pattern.permute.xlu0 0
        %540 = vperm.xlu0 %539, %v494
        %v541 = vpop.permute.xlu0 %540
        %v543 = vmul.f32 %v495, %v506
        %v544 = vmul.f32 %v496, %v511
        %v545 = vmul.f32 %v497, %v516
        %v546 = vmul.f32 %v498, %v521
        %v547 = vmul.f32 %v499, %v526
        %v548 = vmul.f32 %v500, %v531
        %v549 = vmul.f32 %v501, %v536
        %v550 = vmul.f32 %v502, %v541
        %v551 = vld [vmem:[%s3] sm:$0x1]
        %v553 = vlaneseq
        %v554 = vshrl.u32 %v553, 7
        %v555 = vsub.s32 0, %v554
        %v556 = vrot.slane %v551, %v555
        %v558 = vadd.f32 %v543, %v556
        %v559 = vadd.f32 %v544, %v556
        %v560 = vadd.f32 %v545, %v556
        %v561 = vadd.f32 %v546, %v556
        %v562 = vadd.f32 %v547, %v556
        %v563 = vadd.f32 %v548, %v556
        %v564 = vadd.f32 %v549, %v556
        %v565 = vadd.f32 %v550, %v556
        %v566 = vmax.f32 %v558, 0.0
        %v567 = vmax.f32 %v559, 0.0
        %v568 = vmax.f32 %v560, 0.0
        %v569 = vmax.f32 %v561, 0.0
        %v570 = vmax.f32 %v562, 0.0
        %v571 = vmax.f32 %v563, 0.0
        %v572 = vmax.f32 %v564, 0.0
        %v573 = vmax.f32 %v565, 0.0
        %v574 = vpack.c.bf16 %v567, %v566
        %v575 = vpack.c.bf16 %v569, %v568
        %v576 = vpack.c.bf16 %v571, %v570
        %v577 = vpack.c.bf16 %v573, %v572
        %v578 = vld [vmem:[%s4] sm:$0xf]
        %v579 = vld [vmem:[%s4 + $0x4] sm:$0xf]
        %v580 = vld [vmem:[%s4 + $0x8] sm:$0xf]
        %v581 = vld [vmem:[%s4 + $0xc] sm:$0xf]
        %v582 = vld [vmem:[%s4 + $0x10] sm:$0xf]
        %v583 = vld [vmem:[%s4 + $0x14] sm:$0xf]
        %v584 = vld [vmem:[%s4 + $0x18] sm:$0xf]
        %v585 = vld [vmem:[%s4 + $0x1c] sm:$0xf]
        %v586 = vld [vmem:[%s4 + $0x20] sm:$0xf]
        %v587 = vld [vmem:[%s4 + $0x24] sm:$0xf]
        %v588 = vld [vmem:[%s4 + $0x28] sm:$0xf]
        %v589 = vld [vmem:[%s4 + $0x2c] sm:$0xf]
        %v590 = vld [vmem:[%s4 + $0x30] sm:$0xf]
        %v591 = vld [vmem:[%s4 + $0x34] sm:$0xf]
        %v592 = vld [vmem:[%s4 + $0x38] sm:$0xf]
        %v593 = vld [vmem:[%s4 + $0x3c] sm:$0xf]
        %v610 = vunpack.c.l.b16 %v578
        %v611 = vunpack.c.l.b16 %v579
        %v612 = vunpack.c.l.b16 %v580
        %v613 = vunpack.c.l.b16 %v581
        %v614 = vunpack.c.l.b16 %v582
        %v615 = vunpack.c.l.b16 %v583
        %v616 = vunpack.c.l.b16 %v584
        %v617 = vunpack.c.l.b16 %v585
        %v618 = vunpack.c.l.b16 %v586
        %v619 = vunpack.c.l.b16 %v587
        %v620 = vunpack.c.l.b16 %v588
        %v621 = vunpack.c.l.b16 %v589
        %v622 = vunpack.c.l.b16 %v590
        %v623 = vunpack.c.l.b16 %v591
        %v624 = vunpack.c.l.b16 %v592
        %v625 = vunpack.c.l.b16 %v593
        %v626 = vpack.c.b16 %v611, %v610
        %v627 = vpack.c.b16 %v613, %v612
        %v628 = vpack.c.b16 %v615, %v614
        %v629 = vpack.c.b16 %v617, %v616
        %v630 = vpack.c.b16 %v619, %v618
        %v631 = vpack.c.b16 %v621, %v620
        %v632 = vpack.c.b16 %v623, %v622
        %v633 = vpack.c.b16 %v625, %v624
        %642 = vmatprep.subr.bf16.mxu0 0
        %643 = vmatpush1.bf16.msra.mxu0 %v633
        %644 = vmatprep.subr.bf16.mxu0 0
        %645 = vmatpush1.bf16.msra.mxu0 %v632
        %646 = vmatprep.subr.bf16.mxu0 0
        %647 = vmatpush1.bf16.msra.mxu0 %v631
        %648 = vmatprep.subr.bf16.mxu0 0
        %649 = vmatpush1.bf16.msra.mxu0 %v630
        %650 = vmatprep.subr.bf16.mxu0 0
        %651 = vmatpush1.bf16.msra.mxu0 %v629
        %652 = vmatprep.subr.bf16.mxu0 0
        %653 = vmatpush1.bf16.msra.mxu0 %v628
        %654 = vmatprep.subr.bf16.mxu0 0
        %655 = vmatpush1.bf16.msra.mxu0 %v627
        %656 = vmatprep.subr.bf16.mxu0 0
        %657 = vmatpush1.bf16.msra.mxu0 %v626
        %658 = vmatprep.subr.bf16.mxu0 0
        %659 = vmatpush2.bf16.msra.mxu0 0
        %660 = vmatprep.subr.bf16.mxu0 0
        %661 = vmatpush2.bf16.msra.mxu0 0
        %662 = vmatprep.subr.bf16.mxu0 0
        %663 = vmatpush2.bf16.msra.mxu0 0
        %664 = vmatprep.subr.bf16.mxu0 0
        %665 = vmatpush2.bf16.msra.mxu0 0
        %666 = vmatprep.subr.bf16.mxu0 0
        %667 = vmatpush2.bf16.msra.mxu0 0
        %668 = vmatprep.subr.bf16.mxu0 0
        %669 = vmatpush2.bf16.msra.mxu0 0
        %670 = vmatprep.subr.bf16.mxu0 0
        %671 = vmatpush2.bf16.msra.mxu0 0
        %672 = vmatprep.subr.bf16.mxu0 0
        %673 = vmatpush2.bf16.msra.mxu0 0
        %674 = vmatprep.mubr.bf16.mxu0 0
        %675 = vmatmul.mubr.bf16.gmra.mxu0 %v574
        %v676 = vpop.f32.mrf.mxu0
        %v677 = vadd.f32 0.0, %v676
        %v678 = vpop.f32.mrf.mxu0
        %v679 = vpop.f32.mrf.mxu0
        %v680 = vadd.f32 0.0, %v679
        %v681 = vpop.f32.mrf.mxu0
        %682 = vmatprep.mubr.bf16.mxu0 0
        %683 = vmatmul.mubr.bf16.gmra.mxu0 %v575
        %v684 = vpop.f32.mrf.mxu0
        %v685 = vadd.f32 0.0, %v684
        %v686 = vpop.f32.mrf.mxu0
        %v687 = vpop.f32.mrf.mxu0
        %v688 = vadd.f32 0.0, %v687
        %v689 = vpop.f32.mrf.mxu0
        %690 = vmatprep.mubr.bf16.mxu0 0
        %691 = vmatmul.mubr.bf16.gmra.mxu0 %v576
        %v692 = vpop.f32.mrf.mxu0
        %v693 = vadd.f32 0.0, %v692
        %v694 = vpop.f32.mrf.mxu0
        %v695 = vpop.f32.mrf.mxu0
        %v696 = vadd.f32 0.0, %v695
        %v697 = vpop.f32.mrf.mxu0
        %698 = vmatprep.mubr.bf16.mxu0 0
        %699 = vmatmul.mubr.bf16.gmra.mxu0 %v577
        %v700 = vpop.f32.mrf.mxu0
        %v701 = vadd.f32 0.0, %v700
        %v702 = vpop.f32.mrf.mxu0
        %v703 = vpop.f32.mrf.mxu0
        %v704 = vadd.f32 0.0, %v703
        %v705 = vpop.f32.mrf.mxu0
        %706 = vdwg.mxu0
        %v707 = vmul.f32 %v677, %v506
        %v708 = vmul.f32 %v680, %v511
        %v709 = vmul.f32 %v685, %v516
        %v710 = vmul.f32 %v688, %v521
        %v711 = vmul.f32 %v693, %v526
        %v712 = vmul.f32 %v696, %v531
        %v713 = vmul.f32 %v701, %v536
        %v714 = vmul.f32 %v704, %v541
        %v715 = vpack.c.bf16 %v708, %v707
        %v716 = vpack.c.bf16 %v710, %v709
        %v717 = vpack.c.bf16 %v712, %v711
        %v718 = vpack.c.bf16 %v714, %v713
        %v723 = vunpack.c.l.b16 %v715
        %v724 = vunpack.c.h.b16 %v715
        %v725 = vunpack.c.l.b16 %v716
        %v726 = vunpack.c.h.b16 %v716
        %v727 = vunpack.c.l.b16 %v717
        %v728 = vunpack.c.h.b16 %v717
        %v729 = vunpack.c.l.b16 %v718
        %v730 = vunpack.c.h.b16 %v718
        %v731 = vpack.c.b16 %v723, %v723
        %v732 = vpack.c.b16 %v724, %v724
        %v733 = vpack.c.b16 %v725, %v725
        %v734 = vpack.c.b16 %v726, %v726
        %v735 = vpack.c.b16 %v727, %v727
        %v736 = vpack.c.b16 %v728, %v728
        %v737 = vpack.c.b16 %v729, %v729
        %v738 = vpack.c.b16 %v730, %v730
        %747 = vst [vmem:[%s271] sm:$0xf] %v731
        %748 = vst [vmem:[%s271 + $0x4] sm:$0xf] %v732
        %749 = vst [vmem:[%s271 + $0x8] sm:$0xf] %v733
        %750 = vst [vmem:[%s271 + $0xc] sm:$0xf] %v734
        %751 = vst [vmem:[%s271 + $0x10] sm:$0xf] %v735
        %752 = vst [vmem:[%s271 + $0x14] sm:$0xf] %v736
        %753 = vst [vmem:[%s271 + $0x18] sm:$0xf] %v737
        %754 = vst [vmem:[%s271 + $0x1c] sm:$0xf] %v738
      $region48: #{gcn_model_forward.6} parent=39 // pred_fallthru
        _
      %s755 = smul.u32 8, %s20
      %p756 = scmp.lt.s32.totalorder %s755, 15
      %s757 = scalar_select %p756, %s755, 15
      %s758 = smul.addr %s757, 4
      %s759 = scalar_lea.vmem %s5, %s758
      // Predicated region
      $region49: #{gcn_model_forward.6} parent=39 // pred_check
        %p760 = pneg %p163
      $region50: #{gcn_model_forward.6} parent=39 // pred_check_branch
        %762 = sbr.rel (%p760) target = $region52
      $region51: #{gcn_model_forward.6} parent=39 // pred_region
        %s763 = smul.u32 8, %s20
      $region52: #{gcn_model_forward.6} parent=39 // pred_fallthru
        _
    $region40: #{gcn_model_forward.6} parent=5 // pred_fallthru
      _
    %p764 = scmp.le.s32.totalorder 2, %s11
    // Predicated region
    $region53: #{gcn_model_forward.6} parent=5 // pred_check
      %p765 = pneg %p764
    $region54: #{gcn_model_forward.6} parent=5 // pred_check_branch
      %767 = sbr.rel (%p765) target = $region56
    $region55: #{gcn_model_forward.6} parent=5 // pred_region
      %s768 = ssub.s32 %s11, 2
      // Predicated region
      $region57: #{gcn_model_forward.6} parent=55 // pred_check
        %p769 = pneg %p169
      $region58: #{gcn_model_forward.6} parent=55 // pred_check_branch
        %771 = sbr.rel (%p769) target = $region60
      $region59: #{gcn_model_forward.6} parent=55 // pred_region
        %s772 = smul.u32 8, %s22
        %p773 = scmp.lt.s32.totalorder %s772, 15
        %s774 = scalar_select %p773, %s772, 15
        %s775 = smul.addr %s774, 4
        %s776 = scalar_lea.vmem %s5, %s775
      $region60: #{gcn_model_forward.6} parent=55 // pred_fallthru
        _
    $region56: #{gcn_model_forward.6} parent=5 // pred_fallthru
      _
  $region6: #{gcn_model_forward.6} parent=0 // loop_footer
    %s15 = sadd.s32 1, %s11
  $region7: #{gcn_model_forward.6} parent=0 // loop_footer_branch
    %10 = sbr.rel target = $region3
  $region8: #{gcn_model_forward.6} parent=0 // loop_exit
    _

// kernel: gcn_model_forward.9
$region0: #{gcn_model_forward.9}
  #allocation0 [shape = 'u32[]', space=smem, size = 0x4, offset = 0x4, fixed_abs, tag = 'smem constant byte address 0x4 - core index']
  #allocation1 [shape = 'u32[144,128]{1,0:T(1,128)}', space=vmem, size = 0x12000, scoped, tag = 'internal scratch']
  #allocation2 [shape = 'f32[8,128]{1,0:T(8,128)}', space=vmem, size = 0x1000, scoped, tag = 'scratch operand']
  %s0 = inlined_call_operand.vmem [shape: bf16[8,128], index: 0, kind: input, shape index: {}]
  %s1 = inlined_call_operand.vmem [shape: bf16[128,128], index: 1, kind: input, shape index: {}]
  %s2 = inlined_call_operand.vmem [shape: f32[128,128], index: 2, kind: input, shape index: {}]
  %s3 = inlined_call_operand.vmem [shape: f32[1,128], index: 3, kind: input, shape index: {}]
  %s4 = inlined_call_operand.vmem [shape: f32[128,128], index: 4, kind: input, shape index: {}]
  %s5 = inlined_call_operand.vmem [shape: f32[1,128], index: 5, kind: input, shape index: {}]
  %s6 = inlined_call_operand.vmem [shape: f32[8,128], index: 6, kind: output, shape index: {}]
  %s7 = sld [smem:[#allocation0]]
  $region42: #{gcn_model_forward.9} parent=0
    _
  %s9 = ssub.s32 1, %s7
  %s10 = scalar_select 0, %s9, %s7
  // Predicated region
  $region2: #{gcn_model_forward.9} parent=0 // pred_check
    _
  $region3: #{gcn_model_forward.9} parent=0 // pred_check_branch
    %12 = sbr.rel (0) target = $region5
  $region4: #{gcn_model_forward.9} parent=0 // pred_region
    _
  $region5: #{gcn_model_forward.9} parent=0 // pred_fallthru
    _
  // Predicated region
  $region6: #{gcn_model_forward.9} parent=0 // pred_check
    _
  $region7: #{gcn_model_forward.9} parent=0 // pred_check_branch
    %14 = sbr.rel (0) target = $region9
  $region8: #{gcn_model_forward.9} parent=0 // pred_region
    _
  $region9: #{gcn_model_forward.9} parent=0 // pred_fallthru
    _
  // Predicated region
  $region10: #{gcn_model_forward.9} parent=0 // pred_check
    _
  $region11: #{gcn_model_forward.9} parent=0 // pred_check_branch
    %16 = sbr.rel (0) target = $region13
  $region12: #{gcn_model_forward.9} parent=0 // pred_region
    _
  $region13: #{gcn_model_forward.9} parent=0 // pred_fallthru
    _
  // Predicated region
  $region14: #{gcn_model_forward.9} parent=0 // pred_check
    _
  $region15: #{gcn_model_forward.9} parent=0 // pred_check_branch
    %18 = sbr.rel (0) target = $region17
  $region16: #{gcn_model_forward.9} parent=0 // pred_region
    _
  $region17: #{gcn_model_forward.9} parent=0 // pred_fallthru
    _
  // Predicated region
  $region18: #{gcn_model_forward.9} parent=0 // pred_check
    _
  $region19: #{gcn_model_forward.9} parent=0 // pred_check_branch
    %20 = sbr.rel (0) target = $region21
  $region20: #{gcn_model_forward.9} parent=0 // pred_region
    _
  $region21: #{gcn_model_forward.9} parent=0 // pred_fallthru
    _
  // Predicated region
  $region22: #{gcn_model_forward.9} parent=0 // pred_check
    _
  $region23: #{gcn_model_forward.9} parent=0 // pred_check_branch
    %22 = sbr.rel (0) target = $region25
  $region24: #{gcn_model_forward.9} parent=0 // pred_region
    _
  $region25: #{gcn_model_forward.9} parent=0 // pred_fallthru
    _
  %p24 = scmp.eq.s32.totalorder 0, 0
  // Predicated region
  $region26: #{gcn_model_forward.9} parent=0 // pred_check
    %p25 = pneg %p24
  $region27: #{gcn_model_forward.9} parent=0 // pred_check_branch
    %27 = sbr.rel (%p25) target = $region29
  $region28: #{gcn_model_forward.9} parent=0 // pred_region
    %28 = vst [vmem:[#allocation2] sm:$0xff] 0.0
  $region29: #{gcn_model_forward.9} parent=0 // pred_fallthru
    _
  %v29 = vld [vmem:[#allocation2] sm:$0xff]
  %v30 = vld [vmem:[%s0] sm:$0xf]
  %v31 = vld [vmem:[%s1] sm:$0xf]
  %v32 = vld [vmem:[%s1 + $0x4] sm:$0xf]
  %v33 = vld [vmem:[%s1 + $0x8] sm:$0xf]
  %v34 = vld [vmem:[%s1 + $0xc] sm:$0xf]
  %v35 = vld [vmem:[%s1 + $0x10] sm:$0xf]
  %v36 = vld [vmem:[%s1 + $0x14] sm:$0xf]
  %v37 = vld [vmem:[%s1 + $0x18] sm:$0xf]
  %v38 = vld [vmem:[%s1 + $0x1c] sm:$0xf]
  %v39 = vld [vmem:[%s1 + $0x20] sm:$0xf]
  %v40 = vld [vmem:[%s1 + $0x24] sm:$0xf]
  %v41 = vld [vmem:[%s1 + $0x28] sm:$0xf]
  %v42 = vld [vmem:[%s1 + $0x2c] sm:$0xf]
  %v43 = vld [vmem:[%s1 + $0x30] sm:$0xf]
  %v44 = vld [vmem:[%s1 + $0x34] sm:$0xf]
  %v45 = vld [vmem:[%s1 + $0x38] sm:$0xf]
  %v46 = vld [vmem:[%s1 + $0x3c] sm:$0xf]
  %v63 = vunpack.c.l.b16 %v31
  %v64 = vunpack.c.l.b16 %v32
  %v65 = vunpack.c.l.b16 %v33
  %v66 = vunpack.c.l.b16 %v34
  %v67 = vunpack.c.l.b16 %v35
  %v68 = vunpack.c.l.b16 %v36
  %v69 = vunpack.c.l.b16 %v37
  %v70 = vunpack.c.l.b16 %v38
  %v71 = vunpack.c.l.b16 %v39
  %v72 = vunpack.c.l.b16 %v40
  %v73 = vunpack.c.l.b16 %v41
  %v74 = vunpack.c.l.b16 %v42
  %v75 = vunpack.c.l.b16 %v43
  %v76 = vunpack.c.l.b16 %v44
  %v77 = vunpack.c.l.b16 %v45
  %v78 = vunpack.c.l.b16 %v46
  %v79 = vpack.c.b16 %v64, %v63
  %v80 = vpack.c.b16 %v66, %v65
  %v81 = vpack.c.b16 %v68, %v67
  %v82 = vpack.c.b16 %v70, %v69
  %v83 = vpack.c.b16 %v72, %v71
  %v84 = vpack.c.b16 %v74, %v73
  %v85 = vpack.c.b16 %v76, %v75
  %v86 = vpack.c.b16 %v78, %v77
  %95 = vmatprep.subr.bf16.mxu0 0
  %96 = vmatpush1.bf16.msra.mxu0 %v86
  %97 = vmatprep.subr.bf16.mxu0 0
  %98 = vmatpush1.bf16.msra.mxu0 %v85
  %99 = vmatprep.subr.bf16.mxu0 0
  %100 = vmatpush1.bf16.msra.mxu0 %v84
  %101 = vmatprep.subr.bf16.mxu0 0
  %102 = vmatpush1.bf16.msra.mxu0 %v83
  %103 = vmatprep.subr.bf16.mxu0 0
  %104 = vmatpush1.bf16.msra.mxu0 %v82
  %105 = vmatprep.subr.bf16.mxu0 0
  %106 = vmatpush1.bf16.msra.mxu0 %v81
  %107 = vmatprep.subr.bf16.mxu0 0
  %108 = vmatpush1.bf16.msra.mxu0 %v80
  %109 = vmatprep.subr.bf16.mxu0 0
  %110 = vmatpush1.bf16.msra.mxu0 %v79
  %111 = vmatprep.subr.bf16.mxu0 0
  %112 = vmatpush2.bf16.msra.mxu0 0
  %113 = vmatprep.subr.bf16.mxu0 0
  %114 = vmatpush2.bf16.msra.mxu0 0
  %115 = vmatprep.subr.bf16.mxu0 0
  %116 = vmatpush2.bf16.msra.mxu0 0
  %117 = vmatprep.subr.bf16.mxu0 0
  %118 = vmatpush2.bf16.msra.mxu0 0
  %119 = vmatprep.subr.bf16.mxu0 0
  %120 = vmatpush2.bf16.msra.mxu0 0
  %121 = vmatprep.subr.bf16.mxu0 0
  %122 = vmatpush2.bf16.msra.mxu0 0
  %123 = vmatprep.subr.bf16.mxu0 0
  %124 = vmatpush2.bf16.msra.mxu0 0
  %125 = vmatprep.subr.bf16.mxu0 0
  %126 = vmatpush2.bf16.msra.mxu0 0
  %127 = vmatprep.mubr.bf16.mxu0 0
  %128 = vmatmul.mubr.bf16.gmra.mxu0 %v30
  %v129 = vpop.f32.mrf.mxu0
  %v130 = vadd.f32 0.0, %v129
  %v131 = vpop.f32.mrf.mxu0
  %v132 = vpop.f32.mrf.mxu0
  %v133 = vpop.f32.mrf.mxu0
  %134 = vdwg.mxu0
  %v135 = vadd.f32 %v29, %v130
  %136 = vst [vmem:[#allocation2] sm:$0xff] %v135
  // Predicated region
  $region30: #{gcn_model_forward.9} parent=0 // pred_check
    %p137 = pneg %p24
  $region31: #{gcn_model_forward.9} parent=0 // pred_check_branch
    %139 = sbr.rel (%p137) target = $region33
  $region32: #{gcn_model_forward.9} parent=0 // pred_region
    %v140 = vld [vmem:[#allocation2] sm:$0xff]
    %v141 = vld [vmem:[%s2] sm:$0xff]
    %v142 = vld [vmem:[%s2 + $0x8] sm:$0xff]
    %v143 = vld [vmem:[%s2 + $0x10] sm:$0xff]
    %v144 = vld [vmem:[%s2 + $0x18] sm:$0xff]
    %v145 = vld [vmem:[%s2 + $0x20] sm:$0xff]
    %v146 = vld [vmem:[%s2 + $0x28] sm:$0xff]
    %v147 = vld [vmem:[%s2 + $0x30] sm:$0xff]
    %v148 = vld [vmem:[%s2 + $0x38] sm:$0xff]
    %v149 = vld [vmem:[%s2 + $0x40] sm:$0xff]
    %v150 = vld [vmem:[%s2 + $0x48] sm:$0xff]
    %v151 = vld [vmem:[%s2 + $0x50] sm:$0xff]
    %v152 = vld [vmem:[%s2 + $0x58] sm:$0xff]
    %v153 = vld [vmem:[%s2 + $0x60] sm:$0xff]
    %v154 = vld [vmem:[%s2 + $0x68] sm:$0xff]
    %v155 = vld [vmem:[%s2 + $0x70] sm:$0xff]
    %v156 = vld [vmem:[%s2 + $0x78] sm:$0xff]
    %v157 = vld [vmem:[%s3] sm:$0x1]
    %v159 = vlaneseq
    %v160 = vshrl.u32 %v159, 7
    %v161 = vsub.s32 0, %v160
    %v162 = vrot.slane %v157, %v161
    %164 = vmatprep.subr.mxu0 0.0
    %165 = vmatpush1.msra.mxu0 %v156
    %166 = vmatprep.subr.mxu0 0.0
    %167 = vmatpush1.msra.mxu0 %v155
    %168 = vmatprep.subr.mxu0 0.0
    %169 = vmatpush1.msra.mxu0 %v154
    %170 = vmatprep.subr.mxu0 0.0
    %171 = vmatpush1.msra.mxu0 %v153
    %172 = vmatprep.subr.mxu0 0.0
    %173 = vmatpush1.msra.mxu0 %v152
    %174 = vmatprep.subr.mxu0 0.0
    %175 = vmatpush1.msra.mxu0 %v151
    %176 = vmatprep.subr.mxu0 0.0
    %177 = vmatpush1.msra.mxu0 %v150
    %178 = vmatprep.subr.mxu0 0.0
    %179 = vmatpush1.msra.mxu0 %v149
    %180 = vmatprep.subr.mxu0 0.0
    %181 = vmatpush1.msra.mxu0 %v148
    %182 = vmatprep.subr.mxu0 0.0
    %183 = vmatpush1.msra.mxu0 %v147
    %184 = vmatprep.subr.mxu0 0.0
    %185 = vmatpush1.msra.mxu0 %v146
    %186 = vmatprep.subr.mxu0 0.0
    %187 = vmatpush1.msra.mxu0 %v145
    %188 = vmatprep.subr.mxu0 0.0
    %189 = vmatpush1.msra.mxu0 %v144
    %190 = vmatprep.subr.mxu0 0.0
    %191 = vmatpush1.msra.mxu0 %v143
    %192 = vmatprep.subr.mxu0 0.0
    %193 = vmatpush1.msra.mxu0 %v142
    %194 = vmatprep.subr.mxu0 0.0
    %195 = vmatpush1.msra.mxu0 %v141
    %196 = vmatprep.subr.mxu0 0.0
    %197 = vmatpush2.msra.mxu0 0.0
    %198 = vmatprep.subr.mxu0 0.0
    %199 = vmatpush2.msra.mxu0 0.0
    %200 = vmatprep.subr.mxu0 0.0
    %201 = vmatpush2.msra.mxu0 0.0
    %202 = vmatprep.subr.mxu0 0.0
    %203 = vmatpush2.msra.mxu0 0.0
    %204 = vmatprep.subr.mxu0 0.0
    %205 = vmatpush2.msra.mxu0 0.0
    %206 = vmatprep.subr.mxu0 0.0
    %207 = vmatpush2.msra.mxu0 0.0
    %208 = vmatprep.subr.mxu0 0.0
    %209 = vmatpush2.msra.mxu0 0.0
    %210 = vmatprep.subr.mxu0 0.0
    %211 = vmatpush2.msra.mxu0 0.0
    %212 = vmatprep.subr.mxu0 0.0
    %213 = vmatpush2.msra.mxu0 0.0
    %214 = vmatprep.subr.mxu0 0.0
    %215 = vmatpush2.msra.mxu0 0.0
    %216 = vmatprep.subr.mxu0 0.0
    %217 = vmatpush2.msra.mxu0 0.0
    %218 = vmatprep.subr.mxu0 0.0
    %219 = vmatpush2.msra.mxu0 0.0
    %220 = vmatprep.subr.mxu0 0.0
    %221 = vmatpush2.msra.mxu0 0.0
    %222 = vmatprep.subr.mxu0 0.0
    %223 = vmatpush2.msra.mxu0 0.0
    %224 = vmatprep.subr.mxu0 0.0
    %225 = vmatpush2.msra.mxu0 0.0
    %226 = vmatprep.subr.mxu0 0.0
    %227 = vmatpush2.msra.mxu0 0.0
    %228 = vmatprep.mubr.f32.mxu0 0.0
    %229 = vmatmul.mubr.f32.gmra.mxu0 %v140
    %v230 = vpop.f32.mrf.mxu0
    %v231 = vadd.f32 %v162, %v230
    %v232 = vpop.f32.mrf.mxu0
    %233 = vdwg.mxu0
    %v234 = vmax.f32 %v231, 0.0
    %v235 = vld [vmem:[%s4] sm:$0xff]
    %v236 = vld [vmem:[%s4 + $0x8] sm:$0xff]
    %v237 = vld [vmem:[%s4 + $0x10] sm:$0xff]
    %v238 = vld [vmem:[%s4 + $0x18] sm:$0xff]
    %v239 = vld [vmem:[%s4 + $0x20] sm:$0xff]
    %v240 = vld [vmem:[%s4 + $0x28] sm:$0xff]
    %v241 = vld [vmem:[%s4 + $0x30] sm:$0xff]
    %v242 = vld [vmem:[%s4 + $0x38] sm:$0xff]
    %v243 = vld [vmem:[%s4 + $0x40] sm:$0xff]
    %v244 = vld [vmem:[%s4 + $0x48] sm:$0xff]
    %v245 = vld [vmem:[%s4 + $0x50] sm:$0xff]
    %v246 = vld [vmem:[%s4 + $0x58] sm:$0xff]
    %v247 = vld [vmem:[%s4 + $0x60] sm:$0xff]
    %v248 = vld [vmem:[%s4 + $0x68] sm:$0xff]
    %v249 = vld [vmem:[%s4 + $0x70] sm:$0xff]
    %v250 = vld [vmem:[%s4 + $0x78] sm:$0xff]
    %v251 = vld [vmem:[%s5] sm:$0x1]
    %v253 = vlaneseq
    %v254 = vshrl.u32 %v253, 7
    %v255 = vsub.s32 0, %v254
    %v256 = vrot.slane %v251, %v255
    %258 = vmatprep.subr.mxu0 0.0
    %259 = vmatpush1.msra.mxu0 %v250
    %260 = vmatprep.subr.mxu0 0.0
    %261 = vmatpush1.msra.mxu0 %v249
    %262 = vmatprep.subr.mxu0 0.0
    %263 = vmatpush1.msra.mxu0 %v248
    %264 = vmatprep.subr.mxu0 0.0
    %265 = vmatpush1.msra.mxu0 %v247
    %266 = vmatprep.subr.mxu0 0.0
    %267 = vmatpush1.msra.mxu0 %v246
    %268 = vmatprep.subr.mxu0 0.0
    %269 = vmatpush1.msra.mxu0 %v245
    %270 = vmatprep.subr.mxu0 0.0
    %271 = vmatpush1.msra.mxu0 %v244
    %272 = vmatprep.subr.mxu0 0.0
    %273 = vmatpush1.msra.mxu0 %v243
    %274 = vmatprep.subr.mxu0 0.0
    %275 = vmatpush1.msra.mxu0 %v242
    %276 = vmatprep.subr.mxu0 0.0
    %277 = vmatpush1.msra.mxu0 %v241
    %278 = vmatprep.subr.mxu0 0.0
    %279 = vmatpush1.msra.mxu0 %v240
    %280 = vmatprep.subr.mxu0 0.0
    %281 = vmatpush1.msra.mxu0 %v239
    %282 = vmatprep.subr.mxu0 0.0
    %283 = vmatpush1.msra.mxu0 %v238
    %284 = vmatprep.subr.mxu0 0.0
    %285 = vmatpush1.msra.mxu0 %v237
    %286 = vmatprep.subr.mxu0 0.0
    %287 = vmatpush1.msra.mxu0 %v236
    %288 = vmatprep.subr.mxu0 0.0
    %289 = vmatpush1.msra.mxu0 %v235
    %290 = vmatprep.subr.mxu0 0.0
    %291 = vmatpush2.msra.mxu0 0.0
    %292 = vmatprep.subr.mxu0 0.0
    %293 = vmatpush2.msra.mxu0 0.0
    %294 = vmatprep.subr.mxu0 0.0
    %295 = vmatpush2.msra.mxu0 0.0
    %296 = vmatprep.subr.mxu0 0.0
    %297 = vmatpush2.msra.mxu0 0.0
    %298 = vmatprep.subr.mxu0 0.0
    %299 = vmatpush2.msra.mxu0 0.0
    %300 = vmatprep.subr.mxu0 0.0
    %301 = vmatpush2.msra.mxu0 0.0
    %302 = vmatprep.subr.mxu0 0.0
    %303 = vmatpush2.msra.mxu0 0.0
    %304 = vmatprep.subr.mxu0 0.0
    %305 = vmatpush2.msra.mxu0 0.0
    %306 = vmatprep.subr.mxu0 0.0
    %307 = vmatpush2.msra.mxu0 0.0
    %308 = vmatprep.subr.mxu0 0.0
    %309 = vmatpush2.msra.mxu0 0.0
    %310 = vmatprep.subr.mxu0 0.0
    %311 = vmatpush2.msra.mxu0 0.0
    %312 = vmatprep.subr.mxu0 0.0
    %313 = vmatpush2.msra.mxu0 0.0
    %314 = vmatprep.subr.mxu0 0.0
    %315 = vmatpush2.msra.mxu0 0.0
    %316 = vmatprep.subr.mxu0 0.0
    %317 = vmatpush2.msra.mxu0 0.0
    %318 = vmatprep.subr.mxu0 0.0
    %319 = vmatpush2.msra.mxu0 0.0
    %320 = vmatprep.subr.mxu0 0.0
    %321 = vmatpush2.msra.mxu0 0.0
    %322 = vmatprep.mubr.f32.mxu0 0.0
    %323 = vmatmul.mubr.f32.gmra.mxu0 %v234
    %v324 = vpop.f32.mrf.mxu0
    %v325 = vadd.f32 %v256, %v324
    %v326 = vpop.f32.mrf.mxu0
    %327 = vdwg.mxu0
    %328 = vst [vmem:[%s6] sm:$0xff] %v325
  $region33: #{gcn_model_forward.9} parent=0 // pred_fallthru
    _
  // Predicated region
  $region34: #{gcn_model_forward.9} parent=0 // pred_check
    _
  $region35: #{gcn_model_forward.9} parent=0 // pred_check_branch
    %330 = sbr.rel (0) target = $region37
  $region36: #{gcn_model_forward.9} parent=0 // pred_region
    _
  $region37: #{gcn_model_forward.9} parent=0 // pred_fallthru
    _
  // Predicated region
  $region38: #{gcn_model_forward.9} parent=0 // pred_check
    _
  $region39: #{gcn_model_forward.9} parent=0 // pred_check_branch
    %332 = sbr.rel (0) target = $region41
  $region40: #{gcn_model_forward.9} parent=0 // pred_region
    _
  $region41: #{gcn_model_forward.9} parent=0 // pred_fallthru
    _

</llo_original>
